<compile_context>
chip_gen: v7x
topology: tpu7x:2x2x1
jax: 0.10.0
libtpu: 0.0.40
codegen_flags: <defaults>
</compile_context>

<pallas_src>
import functools

import numpy as np
import jax
import jax.numpy as jnp
from jax.experimental import pallas as pl
from jax.experimental.pallas import tpu as pltpu

KSIZE = 7
PAD = 3


def se_fused_kernel(x_ref, wconv_ref, mask_ref, w1t_ref, b1_ref, w2_ref, b2_ref,
                    out_ref, pad_ref, *, C, H, W, lpad):
    # x_ref:    (C, S) VMEM, S = H*W (lane-dense)
    # wconv_ref:(2*7*7,) SMEM conv weights, flattened [c, kh, kw]
    # mask_ref: (7, S) VMEM 0/1 lane-validity masks for horizontal offsets
    # w1t_ref:  (C, hidden), b1_ref: (1, hidden), w2_ref: (C, hidden), b2_ref: (C, 1)
    # out_ref:  (C, S) VMEM
    # pad_ref:  (2, 2*lpad + S) VMEM scratch (row 0 = avg map, row 1 = max map)
    S = H * W
    x = x_ref[...].astype(jnp.float32)                         # (C, S)

    # ---- spatial attention: channel-wise mean / max (vectorized axis-0 reduce)
    avg = jnp.sum(x, axis=0, keepdims=True) * (1.0 / C)        # (1, S)
    mx = jnp.max(x, axis=0, keepdims=True)                     # (1, S)

    # ---- build zero-padded flat rows; side pads re-zeroed each step because
    # the batch grid axis is "parallel" (no cross-iteration ordering).
    zpad = jnp.zeros((2, lpad), jnp.float32)
    pad_ref[:, 0:lpad] = zpad
    pad_ref[:, lpad + S:2 * lpad + S] = zpad
    pad_ref[0:1, lpad:lpad + S] = avg
    pad_ref[1:2, lpad:lpad + S] = mx

    # ---- 7x7 "same" cross-correlation on the flat rows.
    # For output flat index p = h*W + w and tap (di, dj), the source index is
    # p + di*W + dj.  Vertical overflow lands in the zero padding; horizontal
    # wrap into the neighbouring row is killed by the per-dj lane mask.
    acc = jnp.zeros((1, S), jnp.float32)
    for j in range(KSIZE):
        dj = j - PAD
        inner = jnp.zeros((1, S), jnp.float32)
        for i in range(KSIZE):
            di = i - PAD
            off = lpad + di * W + dj
            w_a = wconv_ref[i * KSIZE + j]                     # avg-channel tap
            w_m = wconv_ref[KSIZE * KSIZE + i * KSIZE + j]     # max-channel tap
            inner = inner + w_a * pad_ref[0:1, off:off + S] \
                          + w_m * pad_ref[1:2, off:off + S]
        if dj == 0:
            acc = acc + inner
        else:
            acc = acc + inner * mask_ref[j:j + 1, :]
    spatial = jax.nn.sigmoid(acc)                              # (1, S)

    # ---- spatial re-weighting + squeeze (global average pool over S)
    sx = x * spatial                                           # (C, S)
    y = jnp.sum(sx, axis=1, keepdims=True) * (1.0 / S)         # (C, 1)

    # ---- excitation MLP on the VPU (tiny dims -> skip the MXU entirely)
    h = jnp.sum(w1t_ref[...] * y, axis=0, keepdims=True) + b1_ref[...]   # (1, hidden)
    h = jnp.maximum(h, 0.0)                                              # ReLU
    z = jnp.sum(w2_ref[...] * h, axis=1, keepdims=True) + b2_ref[...]    # (C, 1)
    z = jax.nn.sigmoid(z)

    # ---- channel re-weighting; lane-dense (last dim = S) store
    out_ref[...] = (sx * z).astype(out_ref.dtype)


def se_module_forward(x, params):
    B, C, H, W = x.shape
    wconv, w1, b1, w2, b2 = params
    hidden = w1.shape[0]
    S = H * W
    lpad = 128
    assert lpad >= PAD * W + PAD, "scratch lane padding too small for this W"

    x_cs = x.reshape(B, C, S).astype(jnp.float32)              # free NCHW view
    wconv_flat = wconv.reshape(-1).astype(jnp.float32)         # (2*7*7,)

    # host-side static lane-validity masks for the 7 horizontal tap offsets
    wcoord = np.arange(S) % W
    masks_np = np.stack(
        [((wcoord + (j - PAD) >= 0) & (wcoord + (j - PAD) < W)).astype(np.float32)
         for j in range(KSIZE)], axis=0)                       # (7, S)
    masks = jnp.asarray(masks_np)

    w1t = jnp.transpose(w1).astype(jnp.float32)                # (C, hidden)
    b1r = b1.reshape(1, hidden).astype(jnp.float32)            # (1, hidden)
    w2m = w2.astype(jnp.float32)                               # (C, hidden)
    b2c = b2.reshape(C, 1).astype(jnp.float32)                 # (C, 1)

    kernel = functools.partial(se_fused_kernel, C=C, H=H, W=W, lpad=lpad)
    out_cs = pl.pallas_call(
        kernel,
        out_shape=jax.ShapeDtypeStruct((B, C, S), jnp.float32),
        grid=(B,),
        in_specs=[
            pl.BlockSpec((None, C, S), lambda b: (b, 0, 0)),
            pl.BlockSpec(memory_space=pltpu.MemorySpace.SMEM),
            pl.BlockSpec((KSIZE, S), lambda b: (0, 0)),
            pl.BlockSpec((C, hidden), lambda b: (0, 0)),
            pl.BlockSpec((1, hidden), lambda b: (0, 0)),
            pl.BlockSpec((C, hidden), lambda b: (0, 0)),
            pl.BlockSpec((C, 1), lambda b: (0, 0)),
        ],
        out_specs=pl.BlockSpec((None, C, S), lambda b: (b, 0, 0)),
        scratch_shapes=[pltpu.VMEM((2, 2 * lpad + S), jnp.float32)],
        compiler_params=pltpu.CompilerParams(
            dimension_semantics=("parallel",)),
    )(x_cs, wconv_flat, masks, w1t, b1r, w2m, b2c)

    return out_cs.reshape(B, C, H, W)


def se_module_reference(x, params):
    """Pure-JAX reference mirroring the PyTorch forward."""
    wconv, w1, b1, w2, b2 = params
    avg = jnp.mean(x, axis=1, keepdims=True)
    mx = jnp.max(x, axis=1, keepdims=True)
    cat = jnp.concatenate([avg, mx], axis=1)                   # (B, 2, H, W)
    conv = jax.lax.conv_general_dilated(
        cat, wconv, window_strides=(1, 1), padding=((PAD, PAD), (PAD, PAD)),
        dimension_numbers=("NCHW", "OIHW", "NCHW"))
    spatial = jax.nn.sigmoid(conv)                             # (B, 1, H, W)
    sx = spatial * x
    y = jnp.mean(sx, axis=(2, 3))                              # (B, C)
    h = jnp.maximum(y @ w1.T + b1, 0.0)
    z = jax.nn.sigmoid(h @ w2.T + b2)                          # (B, C)
    return sx * z[:, :, None, None]


if __name__ == "__main__":
    B, C, H, W = 2, 32, 16, 16
    ratio = 16
    hidden = C // ratio

    key = jax.random.PRNGKey(0)
    kx, kc, k1, kb1, k2, kb2 = jax.random.split(key, 6)
    x = jax.random.normal(kx, (B, C, H, W), jnp.float32)
    wconv = jax.random.normal(kc, (1, 2, KSIZE, KSIZE), jnp.float32) * 0.1
    w1 = jax.random.normal(k1, (hidden, C), jnp.float32) * 0.1
    b1 = jax.random.normal(kb1, (hidden,), jnp.float32) * 0.1
    w2 = jax.random.normal(k2, (C, hidden), jnp.float32) * 0.1
    b2 = jax.random.normal(kb2, (C,), jnp.float32) * 0.1
    params = (wconv, w1, b1, w2, b2)

    out = jax.jit(se_module_forward)(x, params)
    out = jax.block_until_ready(out)

    ref = se_module_reference(x, params)
    assert out.shape == (B, C, H, W)
    max_err = float(jnp.max(jnp.abs(out - ref)))
    assert jnp.allclose(out, ref, atol=1e-4, rtol=1e-4), f"max abs err {max_err}"

    print("KERNEL_OK")
</pallas_src>

<mosaic_0001>
module attributes {stable_mosaic.version = 11 : i64} {
  func.func @se_fused_kernel(%arg0: i32, %arg1: memref<1x32x256xf32, #tpu.memory_space<vmem>>, %arg2: memref<98xf32, #tpu.memory_space<smem>>, %arg3: memref<7x256xf32, #tpu.memory_space<vmem>>, %arg4: memref<32x2xf32, #tpu.memory_space<vmem>>, %arg5: memref<1x2xf32, #tpu.memory_space<vmem>>, %arg6: memref<32x2xf32, #tpu.memory_space<vmem>>, %arg7: memref<32x1xf32, #tpu.memory_space<vmem>>, %arg8: memref<1x32x256xf32, #tpu.memory_space<vmem>>, %arg9: memref<2x512xf32, #tpu.memory_space<vmem>>) attributes {dimension_semantics = [#tpu.dimension_semantics<parallel>], iteration_bounds = array<i64: 2>, scalar_prefetch = 0 : i64, scratch_operands = 1 : i64, tpu.core_type = #tpu.core_type<tc>, window_params = [{transform_indices = @transform_0, window_bounds = array<i64: 1, 32, 256>}, {transform_indices = @transform_1, window_bounds = array<i64: 98>}, {pipeline_mode = #tpu.pipeline_mode<synchronous>, transform_indices = @transform_2, window_bounds = array<i64: 7, 256>}, {pipeline_mode = #tpu.pipeline_mode<synchronous>, transform_indices = @transform_3, window_bounds = array<i64: 32, 2>}, {pipeline_mode = #tpu.pipeline_mode<synchronous>, transform_indices = @transform_4, window_bounds = array<i64: 1, 2>}, {pipeline_mode = #tpu.pipeline_mode<synchronous>, transform_indices = @transform_5, window_bounds = array<i64: 32, 2>}, {pipeline_mode = #tpu.pipeline_mode<synchronous>, transform_indices = @transform_6, window_bounds = array<i64: 32, 1>}, {transform_indices = @transform_7, window_bounds = array<i64: 1, 32, 256>}]} {
    %c0 = arith.constant 0 : index
    %c0_0 = arith.constant 0 : index
    %c0_1 = arith.constant 0 : index
    %0 = vector.load %arg1[%c0, %c0_0, %c0_1] : memref<1x32x256xf32, #tpu.memory_space<vmem>>, vector<1x32x256xf32>
    %1 = vector.shape_cast %0 : vector<1x32x256xf32> to vector<32x256xf32>
    %cst = arith.constant dense<0.000000e+00> : vector<256xf32>
    %2 = vector.multi_reduction <add>, %1, %cst [0] : vector<32x256xf32> to vector<256xf32>
    %3 = vector.shape_cast %2 : vector<256xf32> to vector<1x256xf32>
    %cst_2 = arith.constant 3.125000e-02 : f32
    %4 = vector.broadcast %cst_2 : f32 to vector<1x256xf32>
    %5 = arith.mulf %3, %4 : vector<1x256xf32>
    %cst_3 = arith.constant dense<0xFF800000> : vector<256xf32>
    %6 = vector.multi_reduction <maximumf>, %1, %cst_3 [0] : vector<32x256xf32> to vector<256xf32>
    %7 = vector.shape_cast %6 : vector<256xf32> to vector<1x256xf32>
    %cst_4 = arith.constant 0.000000e+00 : f32
    %8 = vector.broadcast %cst_4 : f32 to vector<2x128xf32>
    %c0_5 = arith.constant 0 : index
    %c0_6 = arith.constant 0 : index
    %9 = vector.load %arg9[%c0_5, %c0_6] : memref<2x512xf32, #tpu.memory_space<vmem>>, vector<2x128xf32>
    tpu.vector_store %arg9[%c0_5, %c0_6], %8 {strides = array<i32>} : memref<2x512xf32, #tpu.memory_space<vmem>>, vector<2x128xf32>,
    %c0_7 = arith.constant 0 : index
    %c384 = arith.constant 384 : index
    %10 = vector.load %arg9[%c0_7, %c384] : memref<2x512xf32, #tpu.memory_space<vmem>>, vector<2x128xf32>
    tpu.vector_store %arg9[%c0_7, %c384], %8 {strides = array<i32>} : memref<2x512xf32, #tpu.memory_space<vmem>>, vector<2x128xf32>,
    %c0_8 = arith.constant 0 : index
    %c128 = arith.constant 128 : index
    %11 = vector.load %arg9[%c0_8, %c128] : memref<2x512xf32, #tpu.memory_space<vmem>>, vector<1x256xf32>
    tpu.vector_store %arg9[%c0_8, %c128], %5 {strides = array<i32>} : memref<2x512xf32, #tpu.memory_space<vmem>>, vector<1x256xf32>,
    %c1 = arith.constant 1 : index
    %c128_9 = arith.constant 128 : index
    %12 = vector.load %arg9[%c1, %c128_9] : memref<2x512xf32, #tpu.memory_space<vmem>>, vector<1x256xf32>
    tpu.vector_store %arg9[%c1, %c128_9], %7 {strides = array<i32>} : memref<2x512xf32, #tpu.memory_space<vmem>>, vector<1x256xf32>,
    %cst_10 = arith.constant 0.000000e+00 : f32
    %13 = vector.broadcast %cst_10 : f32 to vector<1x256xf32>
    %cst_11 = arith.constant 0.000000e+00 : f32
    %14 = vector.broadcast %cst_11 : f32 to vector<1x256xf32>
    %c0_12 = arith.constant 0 : index
    %15 = memref.load %arg2[%c0_12] : memref<98xf32, #tpu.memory_space<smem>>
    %c49 = arith.constant 49 : index
    %16 = memref.load %arg2[%c49] : memref<98xf32, #tpu.memory_space<smem>>
    %c0_13 = arith.constant 0 : index
    %c77 = arith.constant 77 : index
    %17 = vector.load %arg9[%c0_13, %c77] : memref<2x512xf32, #tpu.memory_space<vmem>>, vector<1x256xf32>
    %18 = vector.broadcast %15 : f32 to vector<1x256xf32>
    %19 = arith.mulf %18, %17 : vector<1x256xf32>
    %20 = arith.addf %14, %19 : vector<1x256xf32>
    %c1_14 = arith.constant 1 : index
    %c77_15 = arith.constant 77 : index
    %21 = vector.load %arg9[%c1_14, %c77_15] : memref<2x512xf32, #tpu.memory_space<vmem>>, vector<1x256xf32>
    %22 = vector.broadcast %16 : f32 to vector<1x256xf32>
    %23 = arith.mulf %22, %21 : vector<1x256xf32>
    %24 = arith.addf %20, %23 : vector<1x256xf32>
    %c7 = arith.constant 7 : index
    %25 = memref.load %arg2[%c7] : memref<98xf32, #tpu.memory_space<smem>>
    %c56 = arith.constant 56 : index
    %26 = memref.load %arg2[%c56] : memref<98xf32, #tpu.memory_space<smem>>
    %c0_16 = arith.constant 0 : index
    %c93 = arith.constant 93 : index
    %27 = vector.load %arg9[%c0_16, %c93] : memref<2x512xf32, #tpu.memory_space<vmem>>, vector<1x256xf32>
    %28 = vector.broadcast %25 : f32 to vector<1x256xf32>
    %29 = arith.mulf %28, %27 : vector<1x256xf32>
    %30 = arith.addf %24, %29 : vector<1x256xf32>
    %c1_17 = arith.constant 1 : index
    %c93_18 = arith.constant 93 : index
    %31 = vector.load %arg9[%c1_17, %c93_18] : memref<2x512xf32, #tpu.memory_space<vmem>>, vector<1x256xf32>
    %32 = vector.broadcast %26 : f32 to vector<1x256xf32>
    %33 = arith.mulf %32, %31 : vector<1x256xf32>
    %34 = arith.addf %30, %33 : vector<1x256xf32>
    %c14 = arith.constant 14 : index
    %35 = memref.load %arg2[%c14] : memref<98xf32, #tpu.memory_space<smem>>
    %c63 = arith.constant 63 : index
    %36 = memref.load %arg2[%c63] : memref<98xf32, #tpu.memory_space<smem>>
    %c0_19 = arith.constant 0 : index
    %c109 = arith.constant 109 : index
    %37 = vector.load %arg9[%c0_19, %c109] : memref<2x512xf32, #tpu.memory_space<vmem>>, vector<1x256xf32>
    %38 = vector.broadcast %35 : f32 to vector<1x256xf32>
    %39 = arith.mulf %38, %37 : vector<1x256xf32>
    %40 = arith.addf %34, %39 : vector<1x256xf32>
    %c1_20 = arith.constant 1 : index
    %c109_21 = arith.constant 109 : index
    %41 = vector.load %arg9[%c1_20, %c109_21] : memref<2x512xf32, #tpu.memory_space<vmem>>, vector<1x256xf32>
    %42 = vector.broadcast %36 : f32 to vector<1x256xf32>
    %43 = arith.mulf %42, %41 : vector<1x256xf32>
    %44 = arith.addf %40, %43 : vector<1x256xf32>
    %c21 = arith.constant 21 : index
    %45 = memref.load %arg2[%c21] : memref<98xf32, #tpu.memory_space<smem>>
    %c70 = arith.constant 70 : index
    %46 = memref.load %arg2[%c70] : memref<98xf32, #tpu.memory_space<smem>>
    %c0_22 = arith.constant 0 : index
    %c125 = arith.constant 125 : index
    %47 = vector.load %arg9[%c0_22, %c125] : memref<2x512xf32, #tpu.memory_space<vmem>>, vector<1x256xf32>
    %48 = vector.broadcast %45 : f32 to vector<1x256xf32>
    %49 = arith.mulf %48, %47 : vector<1x256xf32>
    %50 = arith.addf %44, %49 : vector<1x256xf32>
    %c1_23 = arith.constant 1 : index
    %c125_24 = arith.constant 125 : index
    %51 = vector.load %arg9[%c1_23, %c125_24] : memref<2x512xf32, #tpu.memory_space<vmem>>, vector<1x256xf32>
    %52 = vector.broadcast %46 : f32 to vector<1x256xf32>
    %53 = arith.mulf %52, %51 : vector<1x256xf32>
    %54 = arith.addf %50, %53 : vector<1x256xf32>
    %c28 = arith.constant 28 : index
    %55 = memref.load %arg2[%c28] : memref<98xf32, #tpu.memory_space<smem>>
    %c77_25 = arith.constant 77 : index
    %56 = memref.load %arg2[%c77_25] : memref<98xf32, #tpu.memory_space<smem>>
    %c0_26 = arith.constant 0 : index
    %c141 = arith.constant 141 : index
    %57 = vector.load %arg9[%c0_26, %c141] : memref<2x512xf32, #tpu.memory_space<vmem>>, vector<1x256xf32>
    %58 = vector.broadcast %55 : f32 to vector<1x256xf32>
    %59 = arith.mulf %58, %57 : vector<1x256xf32>
    %60 = arith.addf %54, %59 : vector<1x256xf32>
    %c1_27 = arith.constant 1 : index
    %c141_28 = arith.constant 141 : index
    %61 = vector.load %arg9[%c1_27, %c141_28] : memref<2x512xf32, #tpu.memory_space<vmem>>, vector<1x256xf32>
    %62 = vector.broadcast %56 : f32 to vector<1x256xf32>
    %63 = arith.mulf %62, %61 : vector<1x256xf32>
    %64 = arith.addf %60, %63 : vector<1x256xf32>
    %c35 = arith.constant 35 : index
    %65 = memref.load %arg2[%c35] : memref<98xf32, #tpu.memory_space<smem>>
    %c84 = arith.constant 84 : index
    %66 = memref.load %arg2[%c84] : memref<98xf32, #tpu.memory_space<smem>>
    %c0_29 = arith.constant 0 : index
    %c157 = arith.constant 157 : index
    %67 = vector.load %arg9[%c0_29, %c157] : memref<2x512xf32, #tpu.memory_space<vmem>>, vector<1x256xf32>
    %68 = vector.broadcast %65 : f32 to vector<1x256xf32>
    %69 = arith.mulf %68, %67 : vector<1x256xf32>
    %70 = arith.addf %64, %69 : vector<1x256xf32>
    %c1_30 = arith.constant 1 : index
    %c157_31 = arith.constant 157 : index
    %71 = vector.load %arg9[%c1_30, %c157_31] : memref<2x512xf32, #tpu.memory_space<vmem>>, vector<1x256xf32>
    %72 = vector.broadcast %66 : f32 to vector<1x256xf32>
    %73 = arith.mulf %72, %71 : vector<1x256xf32>
    %74 = arith.addf %70, %73 : vector<1x256xf32>
    %c42 = arith.constant 42 : index
    %75 = memref.load %arg2[%c42] : memref<98xf32, #tpu.memory_space<smem>>
    %c91 = arith.constant 91 : index
    %76 = memref.load %arg2[%c91] : memref<98xf32, #tpu.memory_space<smem>>
    %c0_32 = arith.constant 0 : index
    %c173 = arith.constant 173 : index
    %77 = vector.load %arg9[%c0_32, %c173] : memref<2x512xf32, #tpu.memory_space<vmem>>, vector<1x256xf32>
    %78 = vector.broadcast %75 : f32 to vector<1x256xf32>
    %79 = arith.mulf %78, %77 : vector<1x256xf32>
    %80 = arith.addf %74, %79 : vector<1x256xf32>
    %c1_33 = arith.constant 1 : index
    %c173_34 = arith.constant 173 : index
    %81 = vector.load %arg9[%c1_33, %c173_34] : memref<2x512xf32, #tpu.memory_space<vmem>>, vector<1x256xf32>
    %82 = vector.broadcast %76 : f32 to vector<1x256xf32>
    %83 = arith.mulf %82, %81 : vector<1x256xf32>
    %84 = arith.addf %80, %83 : vector<1x256xf32>
    %c0_35 = arith.constant 0 : index
    %c0_36 = arith.constant 0 : index
    %85 = vector.load %arg3[%c0_35, %c0_36] : memref<7x256xf32, #tpu.memory_space<vmem>>, vector<1x256xf32>
    %86 = arith.mulf %84, %85 : vector<1x256xf32>
    %87 = arith.addf %13, %86 : vector<1x256xf32>
    %cst_37 = arith.constant 0.000000e+00 : f32
    %88 = vector.broadcast %cst_37 : f32 to vector<1x256xf32>
    %c1_38 = arith.constant 1 : index
    %89 = memref.load %arg2[%c1_38] : memref<98xf32, #tpu.memory_space<smem>>
    %c50 = arith.constant 50 : index
    %90 = memref.load %arg2[%c50] : memref<98xf32, #tpu.memory_space<smem>>
    %c0_39 = arith.constant 0 : index
    %c78 = arith.constant 78 : index
    %91 = vector.load %arg9[%c0_39, %c78] : memref<2x512xf32, #tpu.memory_space<vmem>>, vector<1x256xf32>
    %92 = vector.broadcast %89 : f32 to vector<1x256xf32>
    %93 = arith.mulf %92, %91 : vector<1x256xf32>
    %94 = arith.addf %88, %93 : vector<1x256xf32>
    %c1_40 = arith.constant 1 : index
    %c78_41 = arith.constant 78 : index
    %95 = vector.load %arg9[%c1_40, %c78_41] : memref<2x512xf32, #tpu.memory_space<vmem>>, vector<1x256xf32>
    %96 = vector.broadcast %90 : f32 to vector<1x256xf32>
    %97 = arith.mulf %96, %95 : vector<1x256xf32>
    %98 = arith.addf %94, %97 : vector<1x256xf32>
    %c8 = arith.constant 8 : index
    %99 = memref.load %arg2[%c8] : memref<98xf32, #tpu.memory_space<smem>>
    %c57 = arith.constant 57 : index
    %100 = memref.load %arg2[%c57] : memref<98xf32, #tpu.memory_space<smem>>
    %c0_42 = arith.constant 0 : index
    %c94 = arith.constant 94 : index
    %101 = vector.load %arg9[%c0_42, %c94] : memref<2x512xf32, #tpu.memory_space<vmem>>, vector<1x256xf32>
    %102 = vector.broadcast %99 : f32 to vector<1x256xf32>
    %103 = arith.mulf %102, %101 : vector<1x256xf32>
    %104 = arith.addf %98, %103 : vector<1x256xf32>
    %c1_43 = arith.constant 1 : index
    %c94_44 = arith.constant 94 : index
    %105 = vector.load %arg9[%c1_43, %c94_44] : memref<2x512xf32, #tpu.memory_space<vmem>>, vector<1x256xf32>
    %106 = vector.broadcast %100 : f32 to vector<1x256xf32>
    %107 = arith.mulf %106, %105 : vector<1x256xf32>
    %108 = arith.addf %104, %107 : vector<1x256xf32>
    %c15 = arith.constant 15 : index
    %109 = memref.load %arg2[%c15] : memref<98xf32, #tpu.memory_space<smem>>
    %c64 = arith.constant 64 : index
    %110 = memref.load %arg2[%c64] : memref<98xf32, #tpu.memory_space<smem>>
    %c0_45 = arith.constant 0 : index
    %c110 = arith.constant 110 : index
    %111 = vector.load %arg9[%c0_45, %c110] : memref<2x512xf32, #tpu.memory_space<vmem>>, vector<1x256xf32>
    %112 = vector.broadcast %109 : f32 to vector<1x256xf32>
    %113 = arith.mulf %112, %111 : vector<1x256xf32>
    %114 = arith.addf %108, %113 : vector<1x256xf32>
    %c1_46 = arith.constant 1 : index
    %c110_47 = arith.constant 110 : index
    %115 = vector.load %arg9[%c1_46, %c110_47] : memref<2x512xf32, #tpu.memory_space<vmem>>, vector<1x256xf32>
    %116 = vector.broadcast %110 : f32 to vector<1x256xf32>
    %117 = arith.mulf %116, %115 : vector<1x256xf32>
    %118 = arith.addf %114, %117 : vector<1x256xf32>
    %c22 = arith.constant 22 : index
    %119 = memref.load %arg2[%c22] : memref<98xf32, #tpu.memory_space<smem>>
    %c71 = arith.constant 71 : index
    %120 = memref.load %arg2[%c71] : memref<98xf32, #tpu.memory_space<smem>>
    %c0_48 = arith.constant 0 : index
    %c126 = arith.constant 126 : index
    %121 = vector.load %arg9[%c0_48, %c126] : memref<2x512xf32, #tpu.memory_space<vmem>>, vector<1x256xf32>
    %122 = vector.broadcast %119 : f32 to vector<1x256xf32>
    %123 = arith.mulf %122, %121 : vector<1x256xf32>
    %124 = arith.addf %118, %123 : vector<1x256xf32>
    %c1_49 = arith.constant 1 : index
    %c126_50 = arith.constant 126 : index
    %125 = vector.load %arg9[%c1_49, %c126_50] : memref<2x512xf32, #tpu.memory_space<vmem>>, vector<1x256xf32>
    %126 = vector.broadcast %120 : f32 to vector<1x256xf32>
    %127 = arith.mulf %126, %125 : vector<1x256xf32>
    %128 = arith.addf %124, %127 : vector<1x256xf32>
    %c29 = arith.constant 29 : index
    %129 = memref.load %arg2[%c29] : memref<98xf32, #tpu.memory_space<smem>>
    %c78_51 = arith.constant 78 : index
    %130 = memref.load %arg2[%c78_51] : memref<98xf32, #tpu.memory_space<smem>>
    %c0_52 = arith.constant 0 : index
    %c142 = arith.constant 142 : index
    %131 = vector.load %arg9[%c0_52, %c142] : memref<2x512xf32, #tpu.memory_space<vmem>>, vector<1x256xf32>
    %132 = vector.broadcast %129 : f32 to vector<1x256xf32>
    %133 = arith.mulf %132, %131 : vector<1x256xf32>
    %134 = arith.addf %128, %133 : vector<1x256xf32>
    %c1_53 = arith.constant 1 : index
    %c142_54 = arith.constant 142 : index
    %135 = vector.load %arg9[%c1_53, %c142_54] : memref<2x512xf32, #tpu.memory_space<vmem>>, vector<1x256xf32>
    %136 = vector.broadcast %130 : f32 to vector<1x256xf32>
    %137 = arith.mulf %136, %135 : vector<1x256xf32>
    %138 = arith.addf %134, %137 : vector<1x256xf32>
    %c36 = arith.constant 36 : index
    %139 = memref.load %arg2[%c36] : memref<98xf32, #tpu.memory_space<smem>>
    %c85 = arith.constant 85 : index
    %140 = memref.load %arg2[%c85] : memref<98xf32, #tpu.memory_space<smem>>
    %c0_55 = arith.constant 0 : index
    %c158 = arith.constant 158 : index
    %141 = vector.load %arg9[%c0_55, %c158] : memref<2x512xf32, #tpu.memory_space<vmem>>, vector<1x256xf32>
    %142 = vector.broadcast %139 : f32 to vector<1x256xf32>
    %143 = arith.mulf %142, %141 : vector<1x256xf32>
    %144 = arith.addf %138, %143 : vector<1x256xf32>
    %c1_56 = arith.constant 1 : index
    %c158_57 = arith.constant 158 : index
    %145 = vector.load %arg9[%c1_56, %c158_57] : memref<2x512xf32, #tpu.memory_space<vmem>>, vector<1x256xf32>
    %146 = vector.broadcast %140 : f32 to vector<1x256xf32>
    %147 = arith.mulf %146, %145 : vector<1x256xf32>
    %148 = arith.addf %144, %147 : vector<1x256xf32>
    %c43 = arith.constant 43 : index
    %149 = memref.load %arg2[%c43] : memref<98xf32, #tpu.memory_space<smem>>
    %c92 = arith.constant 92 : index
    %150 = memref.load %arg2[%c92] : memref<98xf32, #tpu.memory_space<smem>>
    %c0_58 = arith.constant 0 : index
    %c174 = arith.constant 174 : index
    %151 = vector.load %arg9[%c0_58, %c174] : memref<2x512xf32, #tpu.memory_space<vmem>>, vector<1x256xf32>
    %152 = vector.broadcast %149 : f32 to vector<1x256xf32>
    %153 = arith.mulf %152, %151 : vector<1x256xf32>
    %154 = arith.addf %148, %153 : vector<1x256xf32>
    %c1_59 = arith.constant 1 : index
    %c174_60 = arith.constant 174 : index
    %155 = vector.load %arg9[%c1_59, %c174_60] : memref<2x512xf32, #tpu.memory_space<vmem>>, vector<1x256xf32>
    %156 = vector.broadcast %150 : f32 to vector<1x256xf32>
    %157 = arith.mulf %156, %155 : vector<1x256xf32>
    %158 = arith.addf %154, %157 : vector<1x256xf32>
    %c1_61 = arith.constant 1 : index
    %c0_62 = arith.constant 0 : index
    %159 = vector.load %arg3[%c1_61, %c0_62] : memref<7x256xf32, #tpu.memory_space<vmem>>, vector<1x256xf32>
    %160 = arith.mulf %158, %159 : vector<1x256xf32>
    %161 = arith.addf %87, %160 : vector<1x256xf32>
    %cst_63 = arith.constant 0.000000e+00 : f32
    %162 = vector.broadcast %cst_63 : f32 to vector<1x256xf32>
    %c2 = arith.constant 2 : index
    %163 = memref.load %arg2[%c2] : memref<98xf32, #tpu.memory_space<smem>>
    %c51 = arith.constant 51 : index
    %164 = memref.load %arg2[%c51] : memref<98xf32, #tpu.memory_space<smem>>
    %c0_64 = arith.constant 0 : index
    %c79 = arith.constant 79 : index
    %165 = vector.load %arg9[%c0_64, %c79] : memref<2x512xf32, #tpu.memory_space<vmem>>, vector<1x256xf32>
    %166 = vector.broadcast %163 : f32 to vector<1x256xf32>
    %167 = arith.mulf %166, %165 : vector<1x256xf32>
    %168 = arith.addf %162, %167 : vector<1x256xf32>
    %c1_65 = arith.constant 1 : index
    %c79_66 = arith.constant 79 : index
    %169 = vector.load %arg9[%c1_65, %c79_66] : memref<2x512xf32, #tpu.memory_space<vmem>>, vector<1x256xf32>
    %170 = vector.broadcast %164 : f32 to vector<1x256xf32>
    %171 = arith.mulf %170, %169 : vector<1x256xf32>
    %172 = arith.addf %168, %171 : vector<1x256xf32>
    %c9 = arith.constant 9 : index
    %173 = memref.load %arg2[%c9] : memref<98xf32, #tpu.memory_space<smem>>
    %c58 = arith.constant 58 : index
    %174 = memref.load %arg2[%c58] : memref<98xf32, #tpu.memory_space<smem>>
    %c0_67 = arith.constant 0 : index
    %c95 = arith.constant 95 : index
    %175 = vector.load %arg9[%c0_67, %c95] : memref<2x512xf32, #tpu.memory_space<vmem>>, vector<1x256xf32>
    %176 = vector.broadcast %173 : f32 to vector<1x256xf32>
    %177 = arith.mulf %176, %175 : vector<1x256xf32>
    %178 = arith.addf %172, %177 : vector<1x256xf32>
    %c1_68 = arith.constant 1 : index
    %c95_69 = arith.constant 95 : index
    %179 = vector.load %arg9[%c1_68, %c95_69] : memref<2x512xf32, #tpu.memory_space<vmem>>, vector<1x256xf32>
    %180 = vector.broadcast %174 : f32 to vector<1x256xf32>
    %181 = arith.mulf %180, %179 : vector<1x256xf32>
    %182 = arith.addf %178, %181 : vector<1x256xf32>
    %c16 = arith.constant 16 : index
    %183 = memref.load %arg2[%c16] : memref<98xf32, #tpu.memory_space<smem>>
    %c65 = arith.constant 65 : index
    %184 = memref.load %arg2[%c65] : memref<98xf32, #tpu.memory_space<smem>>
    %c0_70 = arith.constant 0 : index
    %c111 = arith.constant 111 : index
    %185 = vector.load %arg9[%c0_70, %c111] : memref<2x512xf32, #tpu.memory_space<vmem>>, vector<1x256xf32>
    %186 = vector.broadcast %183 : f32 to vector<1x256xf32>
    %187 = arith.mulf %186, %185 : vector<1x256xf32>
    %188 = arith.addf %182, %187 : vector<1x256xf32>
    %c1_71 = arith.constant 1 : index
    %c111_72 = arith.constant 111 : index
    %189 = vector.load %arg9[%c1_71, %c111_72] : memref<2x512xf32, #tpu.memory_space<vmem>>, vector<1x256xf32>
    %190 = vector.broadcast %184 : f32 to vector<1x256xf32>
    %191 = arith.mulf %190, %189 : vector<1x256xf32>
    %192 = arith.addf %188, %191 : vector<1x256xf32>
    %c23 = arith.constant 23 : index
    %193 = memref.load %arg2[%c23] : memref<98xf32, #tpu.memory_space<smem>>
    %c72 = arith.constant 72 : index
    %194 = memref.load %arg2[%c72] : memref<98xf32, #tpu.memory_space<smem>>
    %c0_73 = arith.constant 0 : index
    %c127 = arith.constant 127 : index
    %195 = vector.load %arg9[%c0_73, %c127] : memref<2x512xf32, #tpu.memory_space<vmem>>, vector<1x256xf32>
    %196 = vector.broadcast %193 : f32 to vector<1x256xf32>
    %197 = arith.mulf %196, %195 : vector<1x256xf32>
    %198 = arith.addf %192, %197 : vector<1x256xf32>
    %c1_74 = arith.constant 1 : index
    %c127_75 = arith.constant 127 : index
    %199 = vector.load %arg9[%c1_74, %c127_75] : memref<2x512xf32, #tpu.memory_space<vmem>>, vector<1x256xf32>
    %200 = vector.broadcast %194 : f32 to vector<1x256xf32>
    %201 = arith.mulf %200, %199 : vector<1x256xf32>
    %202 = arith.addf %198, %201 : vector<1x256xf32>
    %c30 = arith.constant 30 : index
    %203 = memref.load %arg2[%c30] : memref<98xf32, #tpu.memory_space<smem>>
    %c79_76 = arith.constant 79 : index
    %204 = memref.load %arg2[%c79_76] : memref<98xf32, #tpu.memory_space<smem>>
    %c0_77 = arith.constant 0 : index
    %c143 = arith.constant 143 : index
    %205 = vector.load %arg9[%c0_77, %c143] : memref<2x512xf32, #tpu.memory_space<vmem>>, vector<1x256xf32>
    %206 = vector.broadcast %203 : f32 to vector<1x256xf32>
    %207 = arith.mulf %206, %205 : vector<1x256xf32>
    %208 = arith.addf %202, %207 : vector<1x256xf32>
    %c1_78 = arith.constant 1 : index
    %c143_79 = arith.constant 143 : index
    %209 = vector.load %arg9[%c1_78, %c143_79] : memref<2x512xf32, #tpu.memory_space<vmem>>, vector<1x256xf32>
    %210 = vector.broadcast %204 : f32 to vector<1x256xf32>
    %211 = arith.mulf %210, %209 : vector<1x256xf32>
    %212 = arith.addf %208, %211 : vector<1x256xf32>
    %c37 = arith.constant 37 : index
    %213 = memref.load %arg2[%c37] : memref<98xf32, #tpu.memory_space<smem>>
    %c86 = arith.constant 86 : index
    %214 = memref.load %arg2[%c86] : memref<98xf32, #tpu.memory_space<smem>>
    %c0_80 = arith.constant 0 : index
    %c159 = arith.constant 159 : index
    %215 = vector.load %arg9[%c0_80, %c159] : memref<2x512xf32, #tpu.memory_space<vmem>>, vector<1x256xf32>
    %216 = vector.broadcast %213 : f32 to vector<1x256xf32>
    %217 = arith.mulf %216, %215 : vector<1x256xf32>
    %218 = arith.addf %212, %217 : vector<1x256xf32>
    %c1_81 = arith.constant 1 : index
    %c159_82 = arith.constant 159 : index
    %219 = vector.load %arg9[%c1_81, %c159_82] : memref<2x512xf32, #tpu.memory_space<vmem>>, vector<1x256xf32>
    %220 = vector.broadcast %214 : f32 to vector<1x256xf32>
    %221 = arith.mulf %220, %219 : vector<1x256xf32>
    %222 = arith.addf %218, %221 : vector<1x256xf32>
    %c44 = arith.constant 44 : index
    %223 = memref.load %arg2[%c44] : memref<98xf32, #tpu.memory_space<smem>>
    %c93_83 = arith.constant 93 : index
    %224 = memref.load %arg2[%c93_83] : memref<98xf32, #tpu.memory_space<smem>>
    %c0_84 = arith.constant 0 : index
    %c175 = arith.constant 175 : index
    %225 = vector.load %arg9[%c0_84, %c175] : memref<2x512xf32, #tpu.memory_space<vmem>>, vector<1x256xf32>
    %226 = vector.broadcast %223 : f32 to vector<1x256xf32>
    %227 = arith.mulf %226, %225 : vector<1x256xf32>
    %228 = arith.addf %222, %227 : vector<1x256xf32>
    %c1_85 = arith.constant 1 : index
    %c175_86 = arith.constant 175 : index
    %229 = vector.load %arg9[%c1_85, %c175_86] : memref<2x512xf32, #tpu.memory_space<vmem>>, vector<1x256xf32>
    %230 = vector.broadcast %224 : f32 to vector<1x256xf32>
    %231 = arith.mulf %230, %229 : vector<1x256xf32>
    %232 = arith.addf %228, %231 : vector<1x256xf32>
    %c2_87 = arith.constant 2 : index
    %c0_88 = arith.constant 0 : index
    %233 = vector.load %arg3[%c2_87, %c0_88] : memref<7x256xf32, #tpu.memory_space<vmem>>, vector<1x256xf32>
    %234 = arith.mulf %232, %233 : vector<1x256xf32>
    %235 = arith.addf %161, %234 : vector<1x256xf32>
    %cst_89 = arith.constant 0.000000e+00 : f32
    %236 = vector.broadcast %cst_89 : f32 to vector<1x256xf32>
    %c3 = arith.constant 3 : index
    %237 = memref.load %arg2[%c3] : memref<98xf32, #tpu.memory_space<smem>>
    %c52 = arith.constant 52 : index
    %238 = memref.load %arg2[%c52] : memref<98xf32, #tpu.memory_space<smem>>
    %c0_90 = arith.constant 0 : index
    %c80 = arith.constant 80 : index
    %239 = vector.load %arg9[%c0_90, %c80] : memref<2x512xf32, #tpu.memory_space<vmem>>, vector<1x256xf32>
    %240 = vector.broadcast %237 : f32 to vector<1x256xf32>
    %241 = arith.mulf %240, %239 : vector<1x256xf32>
    %242 = arith.addf %236, %241 : vector<1x256xf32>
    %c1_91 = arith.constant 1 : index
    %c80_92 = arith.constant 80 : index
    %243 = vector.load %arg9[%c1_91, %c80_92] : memref<2x512xf32, #tpu.memory_space<vmem>>, vector<1x256xf32>
    %244 = vector.broadcast %238 : f32 to vector<1x256xf32>
    %245 = arith.mulf %244, %243 : vector<1x256xf32>
    %246 = arith.addf %242, %245 : vector<1x256xf32>
    %c10 = arith.constant 10 : index
    %247 = memref.load %arg2[%c10] : memref<98xf32, #tpu.memory_space<smem>>
    %c59 = arith.constant 59 : index
    %248 = memref.load %arg2[%c59] : memref<98xf32, #tpu.memory_space<smem>>
    %c0_93 = arith.constant 0 : index
    %c96 = arith.constant 96 : index
    %249 = vector.load %arg9[%c0_93, %c96] : memref<2x512xf32, #tpu.memory_space<vmem>>, vector<1x256xf32>
    %250 = vector.broadcast %247 : f32 to vector<1x256xf32>
    %251 = arith.mulf %250, %249 : vector<1x256xf32>
    %252 = arith.addf %246, %251 : vector<1x256xf32>
    %c1_94 = arith.constant 1 : index
    %c96_95 = arith.constant 96 : index
    %253 = vector.load %arg9[%c1_94, %c96_95] : memref<2x512xf32, #tpu.memory_space<vmem>>, vector<1x256xf32>
    %254 = vector.broadcast %248 : f32 to vector<1x256xf32>
    %255 = arith.mulf %254, %253 : vector<1x256xf32>
    %256 = arith.addf %252, %255 : vector<1x256xf32>
    %c17 = arith.constant 17 : index
    %257 = memref.load %arg2[%c17] : memref<98xf32, #tpu.memory_space<smem>>
    %c66 = arith.constant 66 : index
    %258 = memref.load %arg2[%c66] : memref<98xf32, #tpu.memory_space<smem>>
    %c0_96 = arith.constant 0 : index
    %c112 = arith.constant 112 : index
    %259 = vector.load %arg9[%c0_96, %c112] : memref<2x512xf32, #tpu.memory_space<vmem>>, vector<1x256xf32>
    %260 = vector.broadcast %257 : f32 to vector<1x256xf32>
    %261 = arith.mulf %260, %259 : vector<1x256xf32>
    %262 = arith.addf %256, %261 : vector<1x256xf32>
    %c1_97 = arith.constant 1 : index
    %c112_98 = arith.constant 112 : index
    %263 = vector.load %arg9[%c1_97, %c112_98] : memref<2x512xf32, #tpu.memory_space<vmem>>, vector<1x256xf32>
    %264 = vector.broadcast %258 : f32 to vector<1x256xf32>
    %265 = arith.mulf %264, %263 : vector<1x256xf32>
    %266 = arith.addf %262, %265 : vector<1x256xf32>
    %c24 = arith.constant 24 : index
    %267 = memref.load %arg2[%c24] : memref<98xf32, #tpu.memory_space<smem>>
    %c73 = arith.constant 73 : index
    %268 = memref.load %arg2[%c73] : memref<98xf32, #tpu.memory_space<smem>>
    %c0_99 = arith.constant 0 : index
    %c128_100 = arith.constant 128 : index
    %269 = vector.load %arg9[%c0_99, %c128_100] : memref<2x512xf32, #tpu.memory_space<vmem>>, vector<1x256xf32>
    %270 = vector.broadcast %267 : f32 to vector<1x256xf32>
    %271 = arith.mulf %270, %269 : vector<1x256xf32>
    %272 = arith.addf %266, %271 : vector<1x256xf32>
    %c1_101 = arith.constant 1 : index
    %c128_102 = arith.constant 128 : index
    %273 = vector.load %arg9[%c1_101, %c128_102] : memref<2x512xf32, #tpu.memory_space<vmem>>, vector<1x256xf32>
    %274 = vector.broadcast %268 : f32 to vector<1x256xf32>
    %275 = arith.mulf %274, %273 : vector<1x256xf32>
    %276 = arith.addf %272, %275 : vector<1x256xf32>
    %c31 = arith.constant 31 : index
    %277 = memref.load %arg2[%c31] : memref<98xf32, #tpu.memory_space<smem>>
    %c80_103 = arith.constant 80 : index
    %278 = memref.load %arg2[%c80_103] : memref<98xf32, #tpu.memory_space<smem>>
    %c0_104 = arith.constant 0 : index
    %c144 = arith.constant 144 : index
    %279 = vector.load %arg9[%c0_104, %c144] : memref<2x512xf32, #tpu.memory_space<vmem>>, vector<1x256xf32>
    %280 = vector.broadcast %277 : f32 to vector<1x256xf32>
    %281 = arith.mulf %280, %279 : vector<1x256xf32>
    %282 = arith.addf %276, %281 : vector<1x256xf32>
    %c1_105 = arith.constant 1 : index
    %c144_106 = arith.constant 144 : index
    %283 = vector.load %arg9[%c1_105, %c144_106] : memref<2x512xf32, #tpu.memory_space<vmem>>, vector<1x256xf32>
    %284 = vector.broadcast %278 : f32 to vector<1x256xf32>
    %285 = arith.mulf %284, %283 : vector<1x256xf32>
    %286 = arith.addf %282, %285 : vector<1x256xf32>
    %c38 = arith.constant 38 : index
    %287 = memref.load %arg2[%c38] : memref<98xf32, #tpu.memory_space<smem>>
    %c87 = arith.constant 87 : index
    %288 = memref.load %arg2[%c87] : memref<98xf32, #tpu.memory_space<smem>>
    %c0_107 = arith.constant 0 : index
    %c160 = arith.constant 160 : index
    %289 = vector.load %arg9[%c0_107, %c160] : memref<2x512xf32, #tpu.memory_space<vmem>>, vector<1x256xf32>
    %290 = vector.broadcast %287 : f32 to vector<1x256xf32>
    %291 = arith.mulf %290, %289 : vector<1x256xf32>
    %292 = arith.addf %286, %291 : vector<1x256xf32>
    %c1_108 = arith.constant 1 : index
    %c160_109 = arith.constant 160 : index
    %293 = vector.load %arg9[%c1_108, %c160_109] : memref<2x512xf32, #tpu.memory_space<vmem>>, vector<1x256xf32>
    %294 = vector.broadcast %288 : f32 to vector<1x256xf32>
    %295 = arith.mulf %294, %293 : vector<1x256xf32>
    %296 = arith.addf %292, %295 : vector<1x256xf32>
    %c45 = arith.constant 45 : index
    %297 = memref.load %arg2[%c45] : memref<98xf32, #tpu.memory_space<smem>>
    %c94_110 = arith.constant 94 : index
    %298 = memref.load %arg2[%c94_110] : memref<98xf32, #tpu.memory_space<smem>>
    %c0_111 = arith.constant 0 : index
    %c176 = arith.constant 176 : index
    %299 = vector.load %arg9[%c0_111, %c176] : memref<2x512xf32, #tpu.memory_space<vmem>>, vector<1x256xf32>
    %300 = vector.broadcast %297 : f32 to vector<1x256xf32>
    %301 = arith.mulf %300, %299 : vector<1x256xf32>
    %302 = arith.addf %296, %301 : vector<1x256xf32>
    %c1_112 = arith.constant 1 : index
    %c176_113 = arith.constant 176 : index
    %303 = vector.load %arg9[%c1_112, %c176_113] : memref<2x512xf32, #tpu.memory_space<vmem>>, vector<1x256xf32>
    %304 = vector.broadcast %298 : f32 to vector<1x256xf32>
    %305 = arith.mulf %304, %303 : vector<1x256xf32>
    %306 = arith.addf %302, %305 : vector<1x256xf32>
    %307 = arith.addf %235, %306 : vector<1x256xf32>
    %cst_114 = arith.constant 0.000000e+00 : f32
    %308 = vector.broadcast %cst_114 : f32 to vector<1x256xf32>
    %c4 = arith.constant 4 : index
    %309 = memref.load %arg2[%c4] : memref<98xf32, #tpu.memory_space<smem>>
    %c53 = arith.constant 53 : index
    %310 = memref.load %arg2[%c53] : memref<98xf32, #tpu.memory_space<smem>>
    %c0_115 = arith.constant 0 : index
    %c81 = arith.constant 81 : index
    %311 = vector.load %arg9[%c0_115, %c81] : memref<2x512xf32, #tpu.memory_space<vmem>>, vector<1x256xf32>
    %312 = vector.broadcast %309 : f32 to vector<1x256xf32>
    %313 = arith.mulf %312, %311 : vector<1x256xf32>
    %314 = arith.addf %308, %313 : vector<1x256xf32>
    %c1_116 = arith.constant 1 : index
    %c81_117 = arith.constant 81 : index
    %315 = vector.load %arg9[%c1_116, %c81_117] : memref<2x512xf32, #tpu.memory_space<vmem>>, vector<1x256xf32>
    %316 = vector.broadcast %310 : f32 to vector<1x256xf32>
    %317 = arith.mulf %316, %315 : vector<1x256xf32>
    %318 = arith.addf %314, %317 : vector<1x256xf32>
    %c11 = arith.constant 11 : index
    %319 = memref.load %arg2[%c11] : memref<98xf32, #tpu.memory_space<smem>>
    %c60 = arith.constant 60 : index
    %320 = memref.load %arg2[%c60] : memref<98xf32, #tpu.memory_space<smem>>
    %c0_118 = arith.constant 0 : index
    %c97 = arith.constant 97 : index
    %321 = vector.load %arg9[%c0_118, %c97] : memref<2x512xf32, #tpu.memory_space<vmem>>, vector<1x256xf32>
    %322 = vector.broadcast %319 : f32 to vector<1x256xf32>
    %323 = arith.mulf %322, %321 : vector<1x256xf32>
    %324 = arith.addf %318, %323 : vector<1x256xf32>
    %c1_119 = arith.constant 1 : index
    %c97_120 = arith.constant 97 : index
    %325 = vector.load %arg9[%c1_119, %c97_120] : memref<2x512xf32, #tpu.memory_space<vmem>>, vector<1x256xf32>
    %326 = vector.broadcast %320 : f32 to vector<1x256xf32>
    %327 = arith.mulf %326, %325 : vector<1x256xf32>
    %328 = arith.addf %324, %327 : vector<1x256xf32>
    %c18 = arith.constant 18 : index
    %329 = memref.load %arg2[%c18] : memref<98xf32, #tpu.memory_space<smem>>
    %c67 = arith.constant 67 : index
    %330 = memref.load %arg2[%c67] : memref<98xf32, #tpu.memory_space<smem>>
    %c0_121 = arith.constant 0 : index
    %c113 = arith.constant 113 : index
    %331 = vector.load %arg9[%c0_121, %c113] : memref<2x512xf32, #tpu.memory_space<vmem>>, vector<1x256xf32>
    %332 = vector.broadcast %329 : f32 to vector<1x256xf32>
    %333 = arith.mulf %332, %331 : vector<1x256xf32>
    %334 = arith.addf %328, %333 : vector<1x256xf32>
    %c1_122 = arith.constant 1 : index
    %c113_123 = arith.constant 113 : index
    %335 = vector.load %arg9[%c1_122, %c113_123] : memref<2x512xf32, #tpu.memory_space<vmem>>, vector<1x256xf32>
    %336 = vector.broadcast %330 : f32 to vector<1x256xf32>
    %337 = arith.mulf %336, %335 : vector<1x256xf32>
    %338 = arith.addf %334, %337 : vector<1x256xf32>
    %c25 = arith.constant 25 : index
    %339 = memref.load %arg2[%c25] : memref<98xf32, #tpu.memory_space<smem>>
    %c74 = arith.constant 74 : index
    %340 = memref.load %arg2[%c74] : memref<98xf32, #tpu.memory_space<smem>>
    %c0_124 = arith.constant 0 : index
    %c129 = arith.constant 129 : index
    %341 = vector.load %arg9[%c0_124, %c129] : memref<2x512xf32, #tpu.memory_space<vmem>>, vector<1x256xf32>
    %342 = vector.broadcast %339 : f32 to vector<1x256xf32>
    %343 = arith.mulf %342, %341 : vector<1x256xf32>
    %344 = arith.addf %338, %343 : vector<1x256xf32>
    %c1_125 = arith.constant 1 : index
    %c129_126 = arith.constant 129 : index
    %345 = vector.load %arg9[%c1_125, %c129_126] : memref<2x512xf32, #tpu.memory_space<vmem>>, vector<1x256xf32>
    %346 = vector.broadcast %340 : f32 to vector<1x256xf32>
    %347 = arith.mulf %346, %345 : vector<1x256xf32>
    %348 = arith.addf %344, %347 : vector<1x256xf32>
    %c32 = arith.constant 32 : index
    %349 = memref.load %arg2[%c32] : memref<98xf32, #tpu.memory_space<smem>>
    %c81_127 = arith.constant 81 : index
    %350 = memref.load %arg2[%c81_127] : memref<98xf32, #tpu.memory_space<smem>>
    %c0_128 = arith.constant 0 : index
    %c145 = arith.constant 145 : index
    %351 = vector.load %arg9[%c0_128, %c145] : memref<2x512xf32, #tpu.memory_space<vmem>>, vector<1x256xf32>
    %352 = vector.broadcast %349 : f32 to vector<1x256xf32>
    %353 = arith.mulf %352, %351 : vector<1x256xf32>
    %354 = arith.addf %348, %353 : vector<1x256xf32>
    %c1_129 = arith.constant 1 : index
    %c145_130 = arith.constant 145 : index
    %355 = vector.load %arg9[%c1_129, %c145_130] : memref<2x512xf32, #tpu.memory_space<vmem>>, vector<1x256xf32>
    %356 = vector.broadcast %350 : f32 to vector<1x256xf32>
    %357 = arith.mulf %356, %355 : vector<1x256xf32>
    %358 = arith.addf %354, %357 : vector<1x256xf32>
    %c39 = arith.constant 39 : index
    %359 = memref.load %arg2[%c39] : memref<98xf32, #tpu.memory_space<smem>>
    %c88 = arith.constant 88 : index
    %360 = memref.load %arg2[%c88] : memref<98xf32, #tpu.memory_space<smem>>
    %c0_131 = arith.constant 0 : index
    %c161 = arith.constant 161 : index
    %361 = vector.load %arg9[%c0_131, %c161] : memref<2x512xf32, #tpu.memory_space<vmem>>, vector<1x256xf32>
    %362 = vector.broadcast %359 : f32 to vector<1x256xf32>
    %363 = arith.mulf %362, %361 : vector<1x256xf32>
    %364 = arith.addf %358, %363 : vector<1x256xf32>
    %c1_132 = arith.constant 1 : index
    %c161_133 = arith.constant 161 : index
    %365 = vector.load %arg9[%c1_132, %c161_133] : memref<2x512xf32, #tpu.memory_space<vmem>>, vector<1x256xf32>
    %366 = vector.broadcast %360 : f32 to vector<1x256xf32>
    %367 = arith.mulf %366, %365 : vector<1x256xf32>
    %368 = arith.addf %364, %367 : vector<1x256xf32>
    %c46 = arith.constant 46 : index
    %369 = memref.load %arg2[%c46] : memref<98xf32, #tpu.memory_space<smem>>
    %c95_134 = arith.constant 95 : index
    %370 = memref.load %arg2[%c95_134] : memref<98xf32, #tpu.memory_space<smem>>
    %c0_135 = arith.constant 0 : index
    %c177 = arith.constant 177 : index
    %371 = vector.load %arg9[%c0_135, %c177] : memref<2x512xf32, #tpu.memory_space<vmem>>, vector<1x256xf32>
    %372 = vector.broadcast %369 : f32 to vector<1x256xf32>
    %373 = arith.mulf %372, %371 : vector<1x256xf32>
    %374 = arith.addf %368, %373 : vector<1x256xf32>
    %c1_136 = arith.constant 1 : index
    %c177_137 = arith.constant 177 : index
    %375 = vector.load %arg9[%c1_136, %c177_137] : memref<2x512xf32, #tpu.memory_space<vmem>>, vector<1x256xf32>
    %376 = vector.broadcast %370 : f32 to vector<1x256xf32>
    %377 = arith.mulf %376, %375 : vector<1x256xf32>
    %378 = arith.addf %374, %377 : vector<1x256xf32>
    %c4_138 = arith.constant 4 : index
    %c0_139 = arith.constant 0 : index
    %379 = vector.load %arg3[%c4_138, %c0_139] : memref<7x256xf32, #tpu.memory_space<vmem>>, vector<1x256xf32>
    %380 = arith.mulf %378, %379 : vector<1x256xf32>
    %381 = arith.addf %307, %380 : vector<1x256xf32>
    %cst_140 = arith.constant 0.000000e+00 : f32
    %382 = vector.broadcast %cst_140 : f32 to vector<1x256xf32>
    %c5 = arith.constant 5 : index
    %383 = memref.load %arg2[%c5] : memref<98xf32, #tpu.memory_space<smem>>
    %c54 = arith.constant 54 : index
    %384 = memref.load %arg2[%c54] : memref<98xf32, #tpu.memory_space<smem>>
    %c0_141 = arith.constant 0 : index
    %c82 = arith.constant 82 : index
    %385 = vector.load %arg9[%c0_141, %c82] : memref<2x512xf32, #tpu.memory_space<vmem>>, vector<1x256xf32>
    %386 = vector.broadcast %383 : f32 to vector<1x256xf32>
    %387 = arith.mulf %386, %385 : vector<1x256xf32>
    %388 = arith.addf %382, %387 : vector<1x256xf32>
    %c1_142 = arith.constant 1 : index
    %c82_143 = arith.constant 82 : index
    %389 = vector.load %arg9[%c1_142, %c82_143] : memref<2x512xf32, #tpu.memory_space<vmem>>, vector<1x256xf32>
    %390 = vector.broadcast %384 : f32 to vector<1x256xf32>
    %391 = arith.mulf %390, %389 : vector<1x256xf32>
    %392 = arith.addf %388, %391 : vector<1x256xf32>
    %c12 = arith.constant 12 : index
    %393 = memref.load %arg2[%c12] : memref<98xf32, #tpu.memory_space<smem>>
    %c61 = arith.constant 61 : index
    %394 = memref.load %arg2[%c61] : memref<98xf32, #tpu.memory_space<smem>>
    %c0_144 = arith.constant 0 : index
    %c98 = arith.constant 98 : index
    %395 = vector.load %arg9[%c0_144, %c98] : memref<2x512xf32, #tpu.memory_space<vmem>>, vector<1x256xf32>
    %396 = vector.broadcast %393 : f32 to vector<1x256xf32>
    %397 = arith.mulf %396, %395 : vector<1x256xf32>
    %398 = arith.addf %392, %397 : vector<1x256xf32>
    %c1_145 = arith.constant 1 : index
    %c98_146 = arith.constant 98 : index
    %399 = vector.load %arg9[%c1_145, %c98_146] : memref<2x512xf32, #tpu.memory_space<vmem>>, vector<1x256xf32>
    %400 = vector.broadcast %394 : f32 to vector<1x256xf32>
    %401 = arith.mulf %400, %399 : vector<1x256xf32>
    %402 = arith.addf %398, %401 : vector<1x256xf32>
    %c19 = arith.constant 19 : index
    %403 = memref.load %arg2[%c19] : memref<98xf32, #tpu.memory_space<smem>>
    %c68 = arith.constant 68 : index
    %404 = memref.load %arg2[%c68] : memref<98xf32, #tpu.memory_space<smem>>
    %c0_147 = arith.constant 0 : index
    %c114 = arith.constant 114 : index
    %405 = vector.load %arg9[%c0_147, %c114] : memref<2x512xf32, #tpu.memory_space<vmem>>, vector<1x256xf32>
    %406 = vector.broadcast %403 : f32 to vector<1x256xf32>
    %407 = arith.mulf %406, %405 : vector<1x256xf32>
    %408 = arith.addf %402, %407 : vector<1x256xf32>
    %c1_148 = arith.constant 1 : index
    %c114_149 = arith.constant 114 : index
    %409 = vector.load %arg9[%c1_148, %c114_149] : memref<2x512xf32, #tpu.memory_space<vmem>>, vector<1x256xf32>
    %410 = vector.broadcast %404 : f32 to vector<1x256xf32>
    %411 = arith.mulf %410, %409 : vector<1x256xf32>
    %412 = arith.addf %408, %411 : vector<1x256xf32>
    %c26 = arith.constant 26 : index
    %413 = memref.load %arg2[%c26] : memref<98xf32, #tpu.memory_space<smem>>
    %c75 = arith.constant 75 : index
    %414 = memref.load %arg2[%c75] : memref<98xf32, #tpu.memory_space<smem>>
    %c0_150 = arith.constant 0 : index
    %c130 = arith.constant 130 : index
    %415 = vector.load %arg9[%c0_150, %c130] : memref<2x512xf32, #tpu.memory_space<vmem>>, vector<1x256xf32>
    %416 = vector.broadcast %413 : f32 to vector<1x256xf32>
    %417 = arith.mulf %416, %415 : vector<1x256xf32>
    %418 = arith.addf %412, %417 : vector<1x256xf32>
    %c1_151 = arith.constant 1 : index
    %c130_152 = arith.constant 130 : index
    %419 = vector.load %arg9[%c1_151, %c130_152] : memref<2x512xf32, #tpu.memory_space<vmem>>, vector<1x256xf32>
    %420 = vector.broadcast %414 : f32 to vector<1x256xf32>
    %421 = arith.mulf %420, %419 : vector<1x256xf32>
    %422 = arith.addf %418, %421 : vector<1x256xf32>
    %c33 = arith.constant 33 : index
    %423 = memref.load %arg2[%c33] : memref<98xf32, #tpu.memory_space<smem>>
    %c82_153 = arith.constant 82 : index
    %424 = memref.load %arg2[%c82_153] : memref<98xf32, #tpu.memory_space<smem>>
    %c0_154 = arith.constant 0 : index
    %c146 = arith.constant 146 : index
    %425 = vector.load %arg9[%c0_154, %c146] : memref<2x512xf32, #tpu.memory_space<vmem>>, vector<1x256xf32>
    %426 = vector.broadcast %423 : f32 to vector<1x256xf32>
    %427 = arith.mulf %426, %425 : vector<1x256xf32>
    %428 = arith.addf %422, %427 : vector<1x256xf32>
    %c1_155 = arith.constant 1 : index
    %c146_156 = arith.constant 146 : index
    %429 = vector.load %arg9[%c1_155, %c146_156] : memref<2x512xf32, #tpu.memory_space<vmem>>, vector<1x256xf32>
    %430 = vector.broadcast %424 : f32 to vector<1x256xf32>
    %431 = arith.mulf %430, %429 : vector<1x256xf32>
    %432 = arith.addf %428, %431 : vector<1x256xf32>
    %c40 = arith.constant 40 : index
    %433 = memref.load %arg2[%c40] : memref<98xf32, #tpu.memory_space<smem>>
    %c89 = arith.constant 89 : index
    %434 = memref.load %arg2[%c89] : memref<98xf32, #tpu.memory_space<smem>>
    %c0_157 = arith.constant 0 : index
    %c162 = arith.constant 162 : index
    %435 = vector.load %arg9[%c0_157, %c162] : memref<2x512xf32, #tpu.memory_space<vmem>>, vector<1x256xf32>
    %436 = vector.broadcast %433 : f32 to vector<1x256xf32>
    %437 = arith.mulf %436, %435 : vector<1x256xf32>
    %438 = arith.addf %432, %437 : vector<1x256xf32>
    %c1_158 = arith.constant 1 : index
    %c162_159 = arith.constant 162 : index
    %439 = vector.load %arg9[%c1_158, %c162_159] : memref<2x512xf32, #tpu.memory_space<vmem>>, vector<1x256xf32>
    %440 = vector.broadcast %434 : f32 to vector<1x256xf32>
    %441 = arith.mulf %440, %439 : vector<1x256xf32>
    %442 = arith.addf %438, %441 : vector<1x256xf32>
    %c47 = arith.constant 47 : index
    %443 = memref.load %arg2[%c47] : memref<98xf32, #tpu.memory_space<smem>>
    %c96_160 = arith.constant 96 : index
    %444 = memref.load %arg2[%c96_160] : memref<98xf32, #tpu.memory_space<smem>>
    %c0_161 = arith.constant 0 : index
    %c178 = arith.constant 178 : index
    %445 = vector.load %arg9[%c0_161, %c178] : memref<2x512xf32, #tpu.memory_space<vmem>>, vector<1x256xf32>
    %446 = vector.broadcast %443 : f32 to vector<1x256xf32>
    %447 = arith.mulf %446, %445 : vector<1x256xf32>
    %448 = arith.addf %442, %447 : vector<1x256xf32>
    %c1_162 = arith.constant 1 : index
    %c178_163 = arith.constant 178 : index
    %449 = vector.load %arg9[%c1_162, %c178_163] : memref<2x512xf32, #tpu.memory_space<vmem>>, vector<1x256xf32>
    %450 = vector.broadcast %444 : f32 to vector<1x256xf32>
    %451 = arith.mulf %450, %449 : vector<1x256xf32>
    %452 = arith.addf %448, %451 : vector<1x256xf32>
    %c5_164 = arith.constant 5 : index
    %c0_165 = arith.constant 0 : index
    %453 = vector.load %arg3[%c5_164, %c0_165] : memref<7x256xf32, #tpu.memory_space<vmem>>, vector<1x256xf32>
    %454 = arith.mulf %452, %453 : vector<1x256xf32>
    %455 = arith.addf %381, %454 : vector<1x256xf32>
    %cst_166 = arith.constant 0.000000e+00 : f32
    %456 = vector.broadcast %cst_166 : f32 to vector<1x256xf32>
    %c6 = arith.constant 6 : index
    %457 = memref.load %arg2[%c6] : memref<98xf32, #tpu.memory_space<smem>>
    %c55 = arith.constant 55 : index
    %458 = memref.load %arg2[%c55] : memref<98xf32, #tpu.memory_space<smem>>
    %c0_167 = arith.constant 0 : index
    %c83 = arith.constant 83 : index
    %459 = vector.load %arg9[%c0_167, %c83] : memref<2x512xf32, #tpu.memory_space<vmem>>, vector<1x256xf32>
    %460 = vector.broadcast %457 : f32 to vector<1x256xf32>
    %461 = arith.mulf %460, %459 : vector<1x256xf32>
    %462 = arith.addf %456, %461 : vector<1x256xf32>
    %c1_168 = arith.constant 1 : index
    %c83_169 = arith.constant 83 : index
    %463 = vector.load %arg9[%c1_168, %c83_169] : memref<2x512xf32, #tpu.memory_space<vmem>>, vector<1x256xf32>
    %464 = vector.broadcast %458 : f32 to vector<1x256xf32>
    %465 = arith.mulf %464, %463 : vector<1x256xf32>
    %466 = arith.addf %462, %465 : vector<1x256xf32>
    %c13 = arith.constant 13 : index
    %467 = memref.load %arg2[%c13] : memref<98xf32, #tpu.memory_space<smem>>
    %c62 = arith.constant 62 : index
    %468 = memref.load %arg2[%c62] : memref<98xf32, #tpu.memory_space<smem>>
    %c0_170 = arith.constant 0 : index
    %c99 = arith.constant 99 : index
    %469 = vector.load %arg9[%c0_170, %c99] : memref<2x512xf32, #tpu.memory_space<vmem>>, vector<1x256xf32>
    %470 = vector.broadcast %467 : f32 to vector<1x256xf32>
    %471 = arith.mulf %470, %469 : vector<1x256xf32>
    %472 = arith.addf %466, %471 : vector<1x256xf32>
    %c1_171 = arith.constant 1 : index
    %c99_172 = arith.constant 99 : index
    %473 = vector.load %arg9[%c1_171, %c99_172] : memref<2x512xf32, #tpu.memory_space<vmem>>, vector<1x256xf32>
    %474 = vector.broadcast %468 : f32 to vector<1x256xf32>
    %475 = arith.mulf %474, %473 : vector<1x256xf32>
    %476 = arith.addf %472, %475 : vector<1x256xf32>
    %c20 = arith.constant 20 : index
    %477 = memref.load %arg2[%c20] : memref<98xf32, #tpu.memory_space<smem>>
    %c69 = arith.constant 69 : index
    %478 = memref.load %arg2[%c69] : memref<98xf32, #tpu.memory_space<smem>>
    %c0_173 = arith.constant 0 : index
    %c115 = arith.constant 115 : index
    %479 = vector.load %arg9[%c0_173, %c115] : memref<2x512xf32, #tpu.memory_space<vmem>>, vector<1x256xf32>
    %480 = vector.broadcast %477 : f32 to vector<1x256xf32>
    %481 = arith.mulf %480, %479 : vector<1x256xf32>
    %482 = arith.addf %476, %481 : vector<1x256xf32>
    %c1_174 = arith.constant 1 : index
    %c115_175 = arith.constant 115 : index
    %483 = vector.load %arg9[%c1_174, %c115_175] : memref<2x512xf32, #tpu.memory_space<vmem>>, vector<1x256xf32>
    %484 = vector.broadcast %478 : f32 to vector<1x256xf32>
    %485 = arith.mulf %484, %483 : vector<1x256xf32>
    %486 = arith.addf %482, %485 : vector<1x256xf32>
    %c27 = arith.constant 27 : index
    %487 = memref.load %arg2[%c27] : memref<98xf32, #tpu.memory_space<smem>>
    %c76 = arith.constant 76 : index
    %488 = memref.load %arg2[%c76] : memref<98xf32, #tpu.memory_space<smem>>
    %c0_176 = arith.constant 0 : index
    %c131 = arith.constant 131 : index
    %489 = vector.load %arg9[%c0_176, %c131] : memref<2x512xf32, #tpu.memory_space<vmem>>, vector<1x256xf32>
    %490 = vector.broadcast %487 : f32 to vector<1x256xf32>
    %491 = arith.mulf %490, %489 : vector<1x256xf32>
    %492 = arith.addf %486, %491 : vector<1x256xf32>
    %c1_177 = arith.constant 1 : index
    %c131_178 = arith.constant 131 : index
    %493 = vector.load %arg9[%c1_177, %c131_178] : memref<2x512xf32, #tpu.memory_space<vmem>>, vector<1x256xf32>
    %494 = vector.broadcast %488 : f32 to vector<1x256xf32>
    %495 = arith.mulf %494, %493 : vector<1x256xf32>
    %496 = arith.addf %492, %495 : vector<1x256xf32>
    %c34 = arith.constant 34 : index
    %497 = memref.load %arg2[%c34] : memref<98xf32, #tpu.memory_space<smem>>
    %c83_179 = arith.constant 83 : index
    %498 = memref.load %arg2[%c83_179] : memref<98xf32, #tpu.memory_space<smem>>
    %c0_180 = arith.constant 0 : index
    %c147 = arith.constant 147 : index
    %499 = vector.load %arg9[%c0_180, %c147] : memref<2x512xf32, #tpu.memory_space<vmem>>, vector<1x256xf32>
    %500 = vector.broadcast %497 : f32 to vector<1x256xf32>
    %501 = arith.mulf %500, %499 : vector<1x256xf32>
    %502 = arith.addf %496, %501 : vector<1x256xf32>
    %c1_181 = arith.constant 1 : index
    %c147_182 = arith.constant 147 : index
    %503 = vector.load %arg9[%c1_181, %c147_182] : memref<2x512xf32, #tpu.memory_space<vmem>>, vector<1x256xf32>
    %504 = vector.broadcast %498 : f32 to vector<1x256xf32>
    %505 = arith.mulf %504, %503 : vector<1x256xf32>
    %506 = arith.addf %502, %505 : vector<1x256xf32>
    %c41 = arith.constant 41 : index
    %507 = memref.load %arg2[%c41] : memref<98xf32, #tpu.memory_space<smem>>
    %c90 = arith.constant 90 : index
    %508 = memref.load %arg2[%c90] : memref<98xf32, #tpu.memory_space<smem>>
    %c0_183 = arith.constant 0 : index
    %c163 = arith.constant 163 : index
    %509 = vector.load %arg9[%c0_183, %c163] : memref<2x512xf32, #tpu.memory_space<vmem>>, vector<1x256xf32>
    %510 = vector.broadcast %507 : f32 to vector<1x256xf32>
    %511 = arith.mulf %510, %509 : vector<1x256xf32>
    %512 = arith.addf %506, %511 : vector<1x256xf32>
    %c1_184 = arith.constant 1 : index
    %c163_185 = arith.constant 163 : index
    %513 = vector.load %arg9[%c1_184, %c163_185] : memref<2x512xf32, #tpu.memory_space<vmem>>, vector<1x256xf32>
    %514 = vector.broadcast %508 : f32 to vector<1x256xf32>
    %515 = arith.mulf %514, %513 : vector<1x256xf32>
    %516 = arith.addf %512, %515 : vector<1x256xf32>
    %c48 = arith.constant 48 : index
    %517 = memref.load %arg2[%c48] : memref<98xf32, #tpu.memory_space<smem>>
    %c97_186 = arith.constant 97 : index
    %518 = memref.load %arg2[%c97_186] : memref<98xf32, #tpu.memory_space<smem>>
    %c0_187 = arith.constant 0 : index
    %c179 = arith.constant 179 : index
    %519 = vector.load %arg9[%c0_187, %c179] : memref<2x512xf32, #tpu.memory_space<vmem>>, vector<1x256xf32>
    %520 = vector.broadcast %517 : f32 to vector<1x256xf32>
    %521 = arith.mulf %520, %519 : vector<1x256xf32>
    %522 = arith.addf %516, %521 : vector<1x256xf32>
    %c1_188 = arith.constant 1 : index
    %c179_189 = arith.constant 179 : index
    %523 = vector.load %arg9[%c1_188, %c179_189] : memref<2x512xf32, #tpu.memory_space<vmem>>, vector<1x256xf32>
    %524 = vector.broadcast %518 : f32 to vector<1x256xf32>
    %525 = arith.mulf %524, %523 : vector<1x256xf32>
    %526 = arith.addf %522, %525 : vector<1x256xf32>
    %c6_190 = arith.constant 6 : index
    %c0_191 = arith.constant 0 : index
    %527 = vector.load %arg3[%c6_190, %c0_191] : memref<7x256xf32, #tpu.memory_space<vmem>>, vector<1x256xf32>
    %528 = arith.mulf %526, %527 : vector<1x256xf32>
    %529 = arith.addf %455, %528 : vector<1x256xf32>
    %530 = arith.negf %529 : vector<1x256xf32>
    %531 = math.exp %530 : vector<1x256xf32>
    %cst_192 = arith.constant 1.000000e+00 : f32
    %532 = vector.broadcast %cst_192 : f32 to vector<1x256xf32>
    %533 = arith.addf %532, %531 : vector<1x256xf32>
    %534 = arith.divf %532, %533 : vector<1x256xf32>
    %535 = vector.broadcast %534 : vector<1x256xf32> to vector<32x256xf32>
    %536 = arith.mulf %1, %535 : vector<32x256xf32>
    %cst_193 = arith.constant dense<0.000000e+00> : vector<32xf32>
    %537 = vector.multi_reduction <add>, %536, %cst_193 [1] : vector<32x256xf32> to vector<32xf32>
    %538 = vector.shape_cast %537 : vector<32xf32> to vector<32x1xf32>
    %cst_194 = arith.constant 3.906250e-03 : f32
    %539 = vector.broadcast %cst_194 : f32 to vector<32x1xf32>
    %540 = arith.mulf %538, %539 : vector<32x1xf32>
    %c0_195 = arith.constant 0 : index
    %c0_196 = arith.constant 0 : index
    %541 = vector.load %arg4[%c0_195, %c0_196] : memref<32x2xf32, #tpu.memory_space<vmem>>, vector<32x2xf32>
    %542 = vector.broadcast %540 : vector<32x1xf32> to vector<32x2xf32>
    %543 = arith.mulf %541, %542 : vector<32x2xf32>
    %cst_197 = arith.constant dense<0.000000e+00> : vector<2xf32>
    %544 = vector.multi_reduction <add>, %543, %cst_197 [0] : vector<32x2xf32> to vector<2xf32>
    %545 = vector.shape_cast %544 : vector<2xf32> to vector<1x2xf32>
    %c0_198 = arith.constant 0 : index
    %c0_199 = arith.constant 0 : index
    %546 = vector.load %arg5[%c0_198, %c0_199] : memref<1x2xf32, #tpu.memory_space<vmem>>, vector<1x2xf32>
    %547 = arith.addf %545, %546 : vector<1x2xf32>
    %cst_200 = arith.constant 0.000000e+00 : f32
    %548 = vector.broadcast %cst_200 : f32 to vector<1x2xf32>
    %549 = arith.maximumf %547, %548 : vector<1x2xf32>
    %c0_201 = arith.constant 0 : index
    %c0_202 = arith.constant 0 : index
    %550 = vector.load %arg6[%c0_201, %c0_202] : memref<32x2xf32, #tpu.memory_space<vmem>>, vector<32x2xf32>
    %551 = vector.broadcast %549 : vector<1x2xf32> to vector<32x2xf32>
    %552 = arith.mulf %550, %551 : vector<32x2xf32>
    %cst_203 = arith.constant dense<0.000000e+00> : vector<32xf32>
    %553 = vector.multi_reduction <add>, %552, %cst_203 [1] : vector<32x2xf32> to vector<32xf32>
    %554 = vector.shape_cast %553 : vector<32xf32> to vector<32x1xf32>
    %c0_204 = arith.constant 0 : index
    %c0_205 = arith.constant 0 : index
    %555 = vector.load %arg7[%c0_204, %c0_205] : memref<32x1xf32, #tpu.memory_space<vmem>>, vector<32x1xf32>
    %556 = arith.addf %554, %555 : vector<32x1xf32>
    %557 = arith.negf %556 : vector<32x1xf32>
    %558 = math.exp %557 : vector<32x1xf32>
    %cst_206 = arith.constant 1.000000e+00 : f32
    %559 = vector.broadcast %cst_206 : f32 to vector<32x1xf32>
    %560 = arith.addf %559, %558 : vector<32x1xf32>
    %561 = arith.divf %559, %560 : vector<32x1xf32>
    %562 = vector.broadcast %561 : vector<32x1xf32> to vector<32x256xf32>
    %563 = arith.mulf %536, %562 : vector<32x256xf32>
    %c0_207 = arith.constant 0 : index
    %c0_208 = arith.constant 0 : index
    %c0_209 = arith.constant 0 : index
    %564 = vector.load %arg8[%c0_207, %c0_208, %c0_209] : memref<1x32x256xf32, #tpu.memory_space<vmem>>, vector<1x32x256xf32>
    %565 = vector.shape_cast %564 : vector<1x32x256xf32> to vector<32x256xf32>
    %566 = vector.shape_cast %563 : vector<32x256xf32> to vector<1x32x256xf32>
    tpu.vector_store %arg8[%c0_207, %c0_208, %c0_209], %566 {strides = array<i32>} : memref<1x32x256xf32, #tpu.memory_space<vmem>>, vector<1x32x256xf32>,
    return
  }
  func.func @transform_0(%arg0: i32) -> (i32, i32, i32) {
    %c0_i32 = arith.constant 0 : i32
    %c0_i32_0 = arith.constant 0 : i32
    %c0_i32_1 = arith.constant 0 : i32
    return %arg0, %c0_i32, %c0_i32_0 : i32, i32, i32
  }
  func.func @transform_1(%arg0: i32) -> i32 {
    %c0_i32 = arith.constant 0 : i32
    %c0_i32_0 = arith.constant 0 : i32
    return %c0_i32 : i32
  }
  func.func @transform_2(%arg0: i32) -> (i32, i32) {
    %c0_i32 = arith.constant 0 : i32
    %c0_i32_0 = arith.constant 0 : i32
    %c0_i32_1 = arith.constant 0 : i32
    return %c0_i32, %c0_i32_0 : i32, i32
  }
  func.func @transform_3(%arg0: i32) -> (i32, i32) {
    %c0_i32 = arith.constant 0 : i32
    %c0_i32_0 = arith.constant 0 : i32
    %c0_i32_1 = arith.constant 0 : i32
    return %c0_i32, %c0_i32_0 : i32, i32
  }
  func.func @transform_4(%arg0: i32) -> (i32, i32) {
    %c0_i32 = arith.constant 0 : i32
    %c0_i32_0 = arith.constant 0 : i32
    %c0_i32_1 = arith.constant 0 : i32
    return %c0_i32, %c0_i32_0 : i32, i32
  }
  func.func @transform_5(%arg0: i32) -> (i32, i32) {
    %c0_i32 = arith.constant 0 : i32
    %c0_i32_0 = arith.constant 0 : i32
    %c0_i32_1 = arith.constant 0 : i32
    return %c0_i32, %c0_i32_0 : i32, i32
  }
  func.func @transform_6(%arg0: i32) -> (i32, i32) {
    %c0_i32 = arith.constant 0 : i32
    %c0_i32_0 = arith.constant 0 : i32
    %c0_i32_1 = arith.constant 0 : i32
    return %c0_i32, %c0_i32_0 : i32, i32
  }
  func.func @transform_7(%arg0: i32) -> (i32, i32, i32) {
    %c0_i32 = arith.constant 0 : i32
    %c0_i32_0 = arith.constant 0 : i32
    %c0_i32_1 = arith.constant 0 : i32
    return %arg0, %c0_i32, %c0_i32_0 : i32, i32, i32
  }
}

</mosaic_0001>

<llo_original>
// kernel: se_module_forward.1
$region0: #{se_module_forward.1}
  #allocation0 [shape = 'u32[]', space=smem, size = 0x4, offset = 0x4, fixed_abs, tag = 'smem constant byte address 0x4 - core index']
  #allocation1 [shape = 'u32[144,128]{1,0:T(1,128)}', space=vmem, size = 0x12000, scoped, tag = 'internal scratch']
  #allocation2 [shape = 'f32[2,512]{1,0:T(2,128)}', space=vmem, size = 0x1000, scoped, tag = 'scratch operand']
  %s0 = inlined_call_operand.vmem [shape: f32[2,32,256], index: 0, kind: input, shape index: {}]
  %s1 = inlined_call_operand.vmem [shape: f32[98], index: 1, kind: input, shape index: {}]
  %s2 = inlined_call_operand.vmem [shape: f32[7,256], index: 2, kind: input, shape index: {}]
  %s3 = inlined_call_operand.vmem [shape: f32[32,2], index: 3, kind: input, shape index: {}]
  %s4 = inlined_call_operand.vmem [shape: f32[1,2], index: 4, kind: input, shape index: {}]
  %s5 = inlined_call_operand.vmem [shape: f32[32,2], index: 5, kind: input, shape index: {}]
  %s6 = inlined_call_operand.vmem [shape: f32[32,1], index: 6, kind: input, shape index: {}]
  %s7 = inlined_call_operand.vmem [shape: f32[2,32,256], index: 7, kind: output, shape index: {}]
  %s8 = sld [smem:[#allocation0]]
  $region65: #{se_module_forward.1} parent=0
    _
  %s10 = ssub.s32 1, %s8
  %s11 = scalar_select 0, %s10, %s8
  $region1: #{se_module_forward.1} parent=0
    #allocation3 [shape = 'u8[512]{0}', space=smem, size = 0x200, scoped, tag = 'input window, operand 1, single buffered']
    #allocation4 [shape = 's32[2]{0}', space=sflag, size = 0x8, scoped, tag = 'scoped memory for se_module_forward.1']
    %12 = vsyncpa [#allocation4], 0
    loop: start=0, step=1, limit=4
    $region2: #{se_module_forward.1} parent=1 // loop_pre_header
      _
    $region3: #{se_module_forward.1} parent=1 // loop_header
      %s14 = sphi 0, %s18
      %p15 = scmp.ge.s32.totalorder %s14, 4
      %s24 = sphi 0, %s26
      %s27 = sphi 0, %s24
      %s28 = sphi 0, %s27
      %s44 = sphi 0, %s28
      %s48 = sphi 0, %s48
      %s50 = sphi 0, %s48
      %s51 = sphi 0, %s50
      %s65 = sphi 0, %s51
      %s69 = sphi 0, %s69
      %s71 = sphi 0, %s69
      %s72 = sphi 0, %s71
      %s86 = sphi 0, %s72
      %s90 = sphi 0, %s90
      %s92 = sphi 0, %s90
      %s93 = sphi 0, %s92
      %s107 = sphi 0, %s93
      %s111 = sphi 0, %s111
      %s113 = sphi 0, %s111
      %s114 = sphi 0, %s113
      %s128 = sphi 0, %s114
      %s132 = sphi 0, %s132
      %s134 = sphi 0, %s132
      %s135 = sphi 0, %s134
      %s149 = sphi 0, %s135
      %s153 = sphi 0, %s153
      %s155 = sphi 0, %s153
      %s156 = sphi 0, %s155
      %s170 = sphi 0, %s156
      %s176 = sphi 0, %s178
      %s179 = sphi 0, %s176
      %s180 = sphi 0, %s179
      %s196 = sphi 0, %s180
    $region4: #{se_module_forward.1} parent=1 // loop_header_branch
      %17 = sbr.rel (%p15) target = $region8
    $region5: #{se_module_forward.1} parent=1 // loop_body
      %s19 = ssub.s32 %s14, 1
      %s20 = ssub.s32 %s14, 2
      %s21 = sadd.s32 %s14, 1
      %s22 = ssub.s32 %s14, %s21
      %p23 = scmp.eq.s32.totalorder %s22, 0
      %s25 = sadd.s32 %s24, 1
      %s26 = scalar_select %p23, %s24, %s25
      %p29 = pneg %p23
      %p30 = scmp.eq.s32.totalorder %s14, 1
      %p31 = por %p29, %p30
      %p32 = scmp.ne.s32.totalorder %s24, %s27
      %p33 = scmp.eq.s32.totalorder %s14, 0
      %p34 = por %p32, %p33
      %p35 = scmp.ne.s32.totalorder %s24, %s27
      %p36 = scmp.eq.s32.totalorder %s19, 1
      %p37 = por %p35, %p36
      %p38 = scmp.ne.s32.totalorder %s27, %s28
      %p39 = scmp.eq.s32.totalorder %s19, 0
      %p40 = por %p38, %p39
      %p41 = scmp.ne.s32.totalorder %s27, %s28
      %p42 = scmp.eq.s32.totalorder %s20, 1
      %p43 = por %p41, %p42
      %p45 = scmp.ne.s32.totalorder %s28, %s44
      %p46 = scmp.eq.s32.totalorder %s20, 0
      %p47 = por %p45, %p46
      %s49 = sadd.s32 %s48, 1
      %p52 = scmp.eq.s32.totalorder %s14, 1
      %p53 = scmp.ne.s32.totalorder %s48, %s50
      %p54 = scmp.eq.s32.totalorder %s14, 0
      %p55 = por %p53, %p54
      %p56 = scmp.ne.s32.totalorder %s48, %s50
      %p57 = scmp.eq.s32.totalorder %s19, 1
      %p58 = por %p56, %p57
      %p59 = scmp.ne.s32.totalorder %s50, %s51
      %p60 = scmp.eq.s32.totalorder %s19, 0
      %p61 = por %p59, %p60
      %p62 = scmp.ne.s32.totalorder %s50, %s51
      %p63 = scmp.eq.s32.totalorder %s20, 1
      %p64 = por %p62, %p63
      %p66 = scmp.ne.s32.totalorder %s51, %s65
      %p67 = scmp.eq.s32.totalorder %s20, 0
      %p68 = por %p66, %p67
      %s70 = sadd.s32 %s69, 1
      %p73 = scmp.eq.s32.totalorder %s14, 1
      %p74 = scmp.ne.s32.totalorder %s69, %s71
      %p75 = scmp.eq.s32.totalorder %s14, 0
      %p76 = por %p74, %p75
      %p77 = scmp.ne.s32.totalorder %s69, %s71
      %p78 = scmp.eq.s32.totalorder %s19, 1
      %p79 = por %p77, %p78
      %p80 = scmp.ne.s32.totalorder %s71, %s72
      %p81 = scmp.eq.s32.totalorder %s19, 0
      %p82 = por %p80, %p81
      %p83 = scmp.ne.s32.totalorder %s71, %s72
      %p84 = scmp.eq.s32.totalorder %s20, 1
      %p85 = por %p83, %p84
      %p87 = scmp.ne.s32.totalorder %s72, %s86
      %p88 = scmp.eq.s32.totalorder %s20, 0
      %p89 = por %p87, %p88
      %s91 = sadd.s32 %s90, 1
      %p94 = scmp.eq.s32.totalorder %s14, 1
      %p95 = scmp.ne.s32.totalorder %s90, %s92
      %p96 = scmp.eq.s32.totalorder %s14, 0
      %p97 = por %p95, %p96
      %p98 = scmp.ne.s32.totalorder %s90, %s92
      %p99 = scmp.eq.s32.totalorder %s19, 1
      %p100 = por %p98, %p99
      %p101 = scmp.ne.s32.totalorder %s92, %s93
      %p102 = scmp.eq.s32.totalorder %s19, 0
      %p103 = por %p101, %p102
      %p104 = scmp.ne.s32.totalorder %s92, %s93
      %p105 = scmp.eq.s32.totalorder %s20, 1
      %p106 = por %p104, %p105
      %p108 = scmp.ne.s32.totalorder %s93, %s107
      %p109 = scmp.eq.s32.totalorder %s20, 0
      %p110 = por %p108, %p109
      %s112 = sadd.s32 %s111, 1
      %p115 = scmp.eq.s32.totalorder %s14, 1
      %p116 = scmp.ne.s32.totalorder %s111, %s113
      %p117 = scmp.eq.s32.totalorder %s14, 0
      %p118 = por %p116, %p117
      %p119 = scmp.ne.s32.totalorder %s111, %s113
      %p120 = scmp.eq.s32.totalorder %s19, 1
      %p121 = por %p119, %p120
      %p122 = scmp.ne.s32.totalorder %s113, %s114
      %p123 = scmp.eq.s32.totalorder %s19, 0
      %p124 = por %p122, %p123
      %p125 = scmp.ne.s32.totalorder %s113, %s114
      %p126 = scmp.eq.s32.totalorder %s20, 1
      %p127 = por %p125, %p126
      %p129 = scmp.ne.s32.totalorder %s114, %s128
      %p130 = scmp.eq.s32.totalorder %s20, 0
      %p131 = por %p129, %p130
      %s133 = sadd.s32 %s132, 1
      %p136 = scmp.eq.s32.totalorder %s14, 1
      %p137 = scmp.ne.s32.totalorder %s132, %s134
      %p138 = scmp.eq.s32.totalorder %s14, 0
      %p139 = por %p137, %p138
      %p140 = scmp.ne.s32.totalorder %s132, %s134
      %p141 = scmp.eq.s32.totalorder %s19, 1
      %p142 = por %p140, %p141
      %p143 = scmp.ne.s32.totalorder %s134, %s135
      %p144 = scmp.eq.s32.totalorder %s19, 0
      %p145 = por %p143, %p144
      %p146 = scmp.ne.s32.totalorder %s134, %s135
      %p147 = scmp.eq.s32.totalorder %s20, 1
      %p148 = por %p146, %p147
      %p150 = scmp.ne.s32.totalorder %s135, %s149
      %p151 = scmp.eq.s32.totalorder %s20, 0
      %p152 = por %p150, %p151
      %s154 = sadd.s32 %s153, 1
      %p157 = scmp.eq.s32.totalorder %s14, 1
      %p158 = scmp.ne.s32.totalorder %s153, %s155
      %p159 = scmp.eq.s32.totalorder %s14, 0
      %p160 = por %p158, %p159
      %p161 = scmp.ne.s32.totalorder %s153, %s155
      %p162 = scmp.eq.s32.totalorder %s19, 1
      %p163 = por %p161, %p162
      %p164 = scmp.ne.s32.totalorder %s155, %s156
      %p165 = scmp.eq.s32.totalorder %s19, 0
      %p166 = por %p164, %p165
      %p167 = scmp.ne.s32.totalorder %s155, %s156
      %p168 = scmp.eq.s32.totalorder %s20, 1
      %p169 = por %p167, %p168
      %p171 = scmp.ne.s32.totalorder %s156, %s170
      %p172 = scmp.eq.s32.totalorder %s20, 0
      %p173 = por %p171, %p172
      %s174 = ssub.s32 %s14, %s21
      %p175 = scmp.eq.s32.totalorder %s174, 0
      %s177 = sadd.s32 %s176, 1
      %s178 = scalar_select %p175, %s176, %s177
      %p181 = pneg %p175
      %p182 = scmp.eq.s32.totalorder %s14, 1
      %p183 = por %p181, %p182
      %p184 = scmp.ne.s32.totalorder %s176, %s179
      %p185 = scmp.eq.s32.totalorder %s14, 0
      %p186 = por %p184, %p185
      %p187 = scmp.ne.s32.totalorder %s176, %s179
      %p188 = scmp.eq.s32.totalorder %s19, 1
      %p189 = por %p187, %p188
      %p190 = scmp.ne.s32.totalorder %s179, %s180
      %p191 = scmp.eq.s32.totalorder %s19, 0
      %p192 = por %p190, %p191
      %p193 = scmp.ne.s32.totalorder %s179, %s180
      %p194 = scmp.eq.s32.totalorder %s20, 1
      %p195 = por %p193, %p194
      %p197 = scmp.ne.s32.totalorder %s180, %s196
      %p198 = scmp.eq.s32.totalorder %s20, 0
      %p199 = por %p197, %p198
      %p200 = scmp.le.s32.totalorder 1, %s14
      %p201 = scmp.lt.s32.totalorder %s14, 3
      %p202 = pnand %p200, %p201
      %p203 = pneg %p202
      // Predicated region
      $region9: #{se_module_forward.1} parent=5 // pred_check
        _
      $region10: #{se_module_forward.1} parent=5 // pred_check_branch
        %205 = sbr.rel (%p202) target = $region12
      $region11: #{se_module_forward.1} parent=5 // pred_region
        %s206 = ssub.s32 %s14, 1
        // Predicated region
        $region13: #{se_module_forward.1} parent=11 // pred_check
          %p207 = pneg %p61
        $region14: #{se_module_forward.1} parent=11 // pred_check_branch
          %209 = sbr.rel (%p207) target = $region16
        $region15: #{se_module_forward.1} parent=11 // pred_region
          %s211 = ssub.s32 16, 16
          %212 = vsyncadd [#allocation4], %s211
          %s214 = sshll.u32 %s1, 4
          %s215 = int_to_ptr.vmem [resolvable:$true] %s214
          %217 = dma.vmem_to_smem %s215, 16, [#allocation3], [#allocation4]
        $region16: #{se_module_forward.1} parent=11 // pred_fallthru
          _
        // Predicated region
        $region17: #{se_module_forward.1} parent=11 // pred_check
          %p218 = pneg %p82
        $region18: #{se_module_forward.1} parent=11 // pred_check_branch
          %220 = sbr.rel (%p218) target = $region20
        $region19: #{se_module_forward.1} parent=11 // pred_region
          _
        $region20: #{se_module_forward.1} parent=11 // pred_fallthru
          _
        // Predicated region
        $region21: #{se_module_forward.1} parent=11 // pred_check
          %p221 = pneg %p103
        $region22: #{se_module_forward.1} parent=11 // pred_check_branch
          %223 = sbr.rel (%p221) target = $region24
        $region23: #{se_module_forward.1} parent=11 // pred_region
          _
        $region24: #{se_module_forward.1} parent=11 // pred_fallthru
          _
        // Predicated region
        $region25: #{se_module_forward.1} parent=11 // pred_check
          %p224 = pneg %p124
        $region26: #{se_module_forward.1} parent=11 // pred_check_branch
          %226 = sbr.rel (%p224) target = $region28
        $region27: #{se_module_forward.1} parent=11 // pred_region
          _
        $region28: #{se_module_forward.1} parent=11 // pred_fallthru
          _
        // Predicated region
        $region29: #{se_module_forward.1} parent=11 // pred_check
          %p227 = pneg %p145
        $region30: #{se_module_forward.1} parent=11 // pred_check_branch
          %229 = sbr.rel (%p227) target = $region32
        $region31: #{se_module_forward.1} parent=11 // pred_region
          _
        $region32: #{se_module_forward.1} parent=11 // pred_fallthru
          _
        // Predicated region
        $region33: #{se_module_forward.1} parent=11 // pred_check
          %p230 = pneg %p166
        $region34: #{se_module_forward.1} parent=11 // pred_check_branch
          %232 = sbr.rel (%p230) target = $region36
        $region35: #{se_module_forward.1} parent=11 // pred_region
          _
        $region36: #{se_module_forward.1} parent=11 // pred_fallthru
          _
      $region12: #{se_module_forward.1} parent=5 // pred_fallthru
        _
      %p233 = scmp.lt.s32.totalorder %s14, 2
      // Predicated region
      $region37: #{se_module_forward.1} parent=5 // pred_check
        %p234 = pneg %p233
      $region38: #{se_module_forward.1} parent=5 // pred_check_branch
        %236 = sbr.rel (%p234) target = $region40
      $region39: #{se_module_forward.1} parent=5 // pred_region
        // Predicated region
        $region41: #{se_module_forward.1} parent=39 // pred_check
          %p237 = pneg %p34
        $region42: #{se_module_forward.1} parent=39 // pred_check_branch
          %239 = sbr.rel (%p237) target = $region44
        $region43: #{se_module_forward.1} parent=39 // pred_region
          %p240 = scmp.lt.s32.totalorder %s14, 1
          %s241 = scalar_select %p240, %s14, 1
          %s242 = smul.addr %s241, 8
          %s243 = smul.addr %s242, 8
          %s244 = scalar_lea.vmem %s0, %s243
        $region44: #{se_module_forward.1} parent=39 // pred_fallthru
          _
      $region40: #{se_module_forward.1} parent=5 // pred_fallthru
        _
      %p245 = scmp.le.s32.totalorder 1, %s14
      %p246 = scmp.lt.s32.totalorder %s14, 3
      %p247 = pnand %p245, %p246
      %p248 = pneg %p247
      // Predicated region
      $region45: #{se_module_forward.1} parent=5 // pred_check
        _
      $region46: #{se_module_forward.1} parent=5 // pred_check_branch
        %250 = sbr.rel (%p247) target = $region48
      $region47: #{se_module_forward.1} parent=5 // pred_region
        %s251 = ssub.s32 %s14, 1
        // Predicated region
        $region49: #{se_module_forward.1} parent=47 // pred_check
          %p252 = pneg %p61
        $region50: #{se_module_forward.1} parent=47 // pred_check_branch
          %254 = sbr.rel (%p252) target = $region52
        $region51: #{se_module_forward.1} parent=47 // pred_region
          %255 = dma.done [#allocation4], 16
        $region52: #{se_module_forward.1} parent=47 // pred_fallthru
          _
        %256 = sfence
        %p257 = scmp.lt.s32.totalorder %s19, 1
        %s258 = scalar_select %p257, %s19, 1
        %s259 = smul.addr %s258, 8
        %s260 = smul.addr %s259, 8
        %s261 = scalar_lea.vmem %s0, %s260
        %p262 = pneg %p40
        %p263 = pneg %p37
        %p264 = pneg %p61
        %p265 = pneg %p58
        %p266 = pneg %p82
        %p267 = pneg %p79
        %p268 = pneg %p103
        %p269 = pneg %p100
        %p270 = pneg %p124
        %p271 = pneg %p121
        %p272 = pneg %p145
        %p273 = pneg %p142
        %p274 = pneg %p166
        %p275 = pneg %p163
        %p276 = pneg %p192
        %p277 = pneg %p189
        %p278 = scmp.lt.s32.totalorder %s19, 1
        %s279 = scalar_select %p278, %s19, 1
        %s280 = smul.addr %s279, 8
        %s281 = smul.addr %s280, 8
        %s282 = scalar_lea.vmem %s7, %s281
        %p283 = scmp.lt.s32.totalorder %s19, 1
        %s284 = scalar_select %p283, %s19, 1
        %s285 = smul.addr %s284, 8
        %s286 = smul.addr %s285, 8
        %s287 = scalar_lea.vmem %s0, %s286
        %p288 = scmp.lt.s32.totalorder %s19, 1
        %s289 = scalar_select %p288, %s19, 1
        %s290 = smul.addr %s289, 8
        %s291 = smul.addr %s290, 8
        %s292 = scalar_lea.vmem %s7, %s291
        %v293 = vld [vmem:[%s287] sm:$0xff]
        %v294 = vld [vmem:[%s287 + $0x8] sm:$0xff]
        %v295 = vld [vmem:[%s287 + $0x10] sm:$0xff]
        %v296 = vld [vmem:[%s287 + $0x18] sm:$0xff]
        %v297 = vld [vmem:[%s287 + $0x20] sm:$0xff]
        %v298 = vld [vmem:[%s287 + $0x28] sm:$0xff]
        %v299 = vld [vmem:[%s287 + $0x30] sm:$0xff]
        %v300 = vld [vmem:[%s287 + $0x38] sm:$0xff]
        %v301 = vadd.f32 %v293, %v295
        %v302 = vadd.f32 %v301, %v297
        %v303 = vadd.f32 %v302, %v299
        %v304 = vrot.slane %v303, 4
        %v305 = vadd.f32 %v303, %v304
        %v306 = vrot.slane %v305, 2
        %v307 = vadd.f32 %v305, %v306
        %v308 = vrot.slane %v307, 1
        %v309 = vadd.f32 %v307, %v308
        %v310 = vadd.f32 %v294, %v296
        %v311 = vadd.f32 %v310, %v298
        %v312 = vadd.f32 %v311, %v300
        %v313 = vrot.slane %v312, 4
        %v314 = vadd.f32 %v312, %v313
        %v315 = vrot.slane %v314, 2
        %v316 = vadd.f32 %v314, %v315
        %v317 = vrot.slane %v316, 1
        %v318 = vadd.f32 %v316, %v317
        %v319 = vmul.f32 %v309, 0.03125
        %v320 = vmul.f32 %v318, 0.03125
        %v321 = vmax.f32 %v293, %v297
        %v322 = vmax.f32 %v295, %v299
        %v323 = vmax.f32 %v321, %v322
        %v324 = vrot.slane %v323, 4
        %v325 = vmax.f32 %v323, %v324
        %v326 = vrot.slane %v325, 2
        %v327 = vmax.f32 %v325, %v326
        %v328 = vrot.slane %v327, 1
        %v329 = vmax.f32 %v327, %v328
        %v330 = vmax.f32 %v294, %v298
        %v331 = vmax.f32 %v296, %v300
        %v332 = vmax.f32 %v330, %v331
        %v333 = vrot.slane %v332, 4
        %v334 = vmax.f32 %v332, %v333
        %v335 = vrot.slane %v334, 2
        %v336 = vmax.f32 %v334, %v335
        %v337 = vrot.slane %v336, 1
        %v338 = vmax.f32 %v336, %v337
        %339 = vst [vmem:[#allocation2] sm:$0x3] 0.0
        %340 = vst [vmem:[#allocation2 + $0x6] sm:$0x3] 0.0
        %v343 = vcombine.low %v319, %v320
        %v345 = vunpack.c.l.s4 1966171168
        %v346 = vunpack.c.0.s8 %v345
        %v347 = vlaneseq
        %v348 = vshrl.u32 %v347, 7
        %v349 = vsub.s32 %v346, %v348
        %v350 = vrot.slane %v343, %v349
        %v352 = vunpack.c.l.s4 1966171168
        %v353 = vunpack.c.0.s8 %v352
        %v354 = vlaneseq
        %v355 = vshrl.u32 %v354, 7
        %v356 = vsub.s32 %v353, %v355
        %v357 = vrot.slane %v350, %v356
        %v359 = vlaneseq
        %vm360 = vcmp.ge.s32.totalorder %v359, 0
        %vm361 = vcmp.lt.s32.totalorder %v359, 256
        %vm362 = vmand %vm360, %vm361
        %s363 = scalar_lea.vmem [#allocation2], 2
        %364 = vst.msk [vmem:[%s363] ss:$2 sm:$0x3] %vm362, %v357
        %v367 = vcombine.low %v329, %v338
        %v369 = vunpack.c.l.s4 1966171168
        %v370 = vunpack.c.0.s8 %v369
        %v371 = vlaneseq
        %v372 = vshrl.u32 %v371, 7
        %v373 = vsub.s32 %v370, %v372
        %v374 = vrot.slane %v367, %v373
        %v376 = vunpack.c.l.s4 1966171168
        %v377 = vunpack.c.0.s8 %v376
        %v378 = vlaneseq
        %v379 = vshrl.u32 %v378, 7
        %v380 = vsub.s32 %v377, %v379
        %v381 = vrot.slane %v374, %v380
        %s383 = scalar_lea.vmem [#allocation2], 3
        %384 = vst.msk [vmem:[%s383] ss:$2 sm:$0x3] %vm362, %v381
        %s385 = sld [smem:[#allocation3]]
        %s386 = sld [smem:[#allocation3 + $0x31]]
        %v387 = vld [vmem:[#allocation2] ss:$2 sm:$0x7]
        %v388 = vstv %s385
        %v389 = vmul.f32 %v388, %v387
        %v390 = vadd.f32 %v389, 0.0
        %s391 = scalar_lea.vmem [#allocation2], 1
        %v392 = vld [vmem:[%s391] ss:$2 sm:$0x7]
        %v393 = vstv %s386
        %v394 = vmul.f32 %v393, %v392
        %v395 = vadd.f32 %v390, %v394
        %s396 = sld [smem:[#allocation3 + $0x7]]
        %s397 = sld [smem:[#allocation3 + $0x38]]
        %v398 = vstv %s396
        %v399 = vmul.f32 %v398, %v387
        %401 = vrot.lane.b32.xlu0 %v399, 112
        %v402 = vpop.permute.xlu0 %401
        %v403 = vrot.slane %v402, 1
        %vm404 = vcmask 916480
        %v405 = vsel %vm404, %v402, %v403
        %v407 = vadd.f32 %v395, %v405
        %v408 = vstv %s397
        %v409 = vmul.f32 %v408, %v392
        %411 = vrot.lane.b32.xlu0 %v409, 112
        %v412 = vpop.permute.xlu0 %411
        %v413 = vrot.slane %v412, 1
        %v414 = vsel %vm404, %v412, %v413
        %v416 = vadd.f32 %v407, %v414
        %s417 = sld [smem:[#allocation3 + $0xe]]
        %s418 = sld [smem:[#allocation3 + $0x3f]]
        %v419 = vstv %s417
        %v420 = vmul.f32 %v419, %v387
        %422 = vrot.lane.b32.xlu0 %v420, 96
        %v423 = vpop.permute.xlu0 %422
        %v424 = vrot.slane %v423, 1
        %vm425 = vcmask 785408
        %v426 = vsel %vm425, %v423, %v424
        %v428 = vadd.f32 %v416, %v426
        %v429 = vstv %s418
        %v430 = vmul.f32 %v429, %v392
        %432 = vrot.lane.b32.xlu0 %v430, 96
        %v433 = vpop.permute.xlu0 %432
        %v434 = vrot.slane %v433, 1
        %v435 = vsel %vm425, %v433, %v434
        %v437 = vadd.f32 %v428, %v435
        %s438 = sld [smem:[#allocation3 + $0x15]]
        %s439 = sld [smem:[#allocation3 + $0x46]]
        %v440 = vstv %s438
        %v441 = vmul.f32 %v440, %v387
        %443 = vrot.lane.b32.xlu0 %v441, 80
        %v444 = vpop.permute.xlu0 %443
        %v445 = vrot.slane %v444, 1
        %vm446 = vcmask 654336
        %v447 = vsel %vm446, %v444, %v445
        %v449 = vadd.f32 %v437, %v447
        %v450 = vstv %s439
        %v451 = vmul.f32 %v450, %v392
        %453 = vrot.lane.b32.xlu0 %v451, 80
        %v454 = vpop.permute.xlu0 %453
        %v455 = vrot.slane %v454, 1
        %v456 = vsel %vm446, %v454, %v455
        %v458 = vadd.f32 %v449, %v456
        %s459 = sld [smem:[#allocation3 + $0x1c]]
        %s460 = sld [smem:[#allocation3 + $0x4d]]
        %s461 = scalar_lea.vmem [#allocation2], 2
        %v462 = vld [vmem:[%s461] ss:$2 sm:$0x7]
        %v463 = vstv %s459
        %v464 = vmul.f32 %v463, %v462
        %466 = vrot.lane.b32.xlu0 %v464, 64
        %v467 = vpop.permute.xlu0 %466
        %v468 = vrot.slane %v467, 7
        %vm469 = vcmask 523264
        %v470 = vsel %vm469, %v468, %v467
        %v472 = vadd.f32 %v458, %v470
        %s473 = scalar_lea.vmem [#allocation2], 3
        %v474 = vld [vmem:[%s473] ss:$2 sm:$0x7]
        %v475 = vstv %s460
        %v476 = vmul.f32 %v475, %v474
        %478 = vrot.lane.b32.xlu0 %v476, 64
        %v479 = vpop.permute.xlu0 %478
        %v480 = vrot.slane %v479, 7
        %v481 = vsel %vm469, %v480, %v479
        %v483 = vadd.f32 %v472, %v481
        %s484 = sld [smem:[#allocation3 + $0x23]]
        %s485 = sld [smem:[#allocation3 + $0x54]]
        %v486 = vstv %s484
        %v487 = vmul.f32 %v486, %v462
        %489 = vrot.lane.b32.xlu0 %v487, 48
        %v490 = vpop.permute.xlu0 %489
        %v491 = vrot.slane %v490, 7
        %vm492 = vcmask 392192
        %v493 = vsel %vm492, %v491, %v490
        %v495 = vadd.f32 %v483, %v493
        %v496 = vstv %s485
        %v497 = vmul.f32 %v496, %v474
        %499 = vrot.lane.b32.xlu0 %v497, 48
        %v500 = vpop.permute.xlu0 %499
        %v501 = vrot.slane %v500, 7
        %v502 = vsel %vm492, %v501, %v500
        %v504 = vadd.f32 %v495, %v502
        %s505 = sld [smem:[#allocation3 + $0x2a]]
        %s506 = sld [smem:[#allocation3 + $0x5b]]
        %v507 = vstv %s505
        %v508 = vmul.f32 %v507, %v462
        %510 = vrot.lane.b32.xlu0 %v508, 32
        %v511 = vpop.permute.xlu0 %510
        %v512 = vrot.slane %v511, 7
        %vm513 = vcmask 261120
        %v514 = vsel %vm513, %v512, %v511
        %v516 = vadd.f32 %v504, %v514
        %v517 = vstv %s506
        %v518 = vmul.f32 %v517, %v474
        %520 = vrot.lane.b32.xlu0 %v518, 32
        %v521 = vpop.permute.xlu0 %520
        %v522 = vrot.slane %v521, 7
        %v523 = vsel %vm513, %v522, %v521
        %v525 = vadd.f32 %v516, %v523
        %v526 = vld [vmem:[%s2] ss:$8 sm:$0x3]
        %528 = vrot.lane.b32.xlu0 %v526, 77
        %v529 = vpop.permute.xlu0 %528
        %v530 = vrot.slane %v529, 7
        %vm531 = vcmask 629760
        %v532 = vsel %vm531, %v530, %v529
        %v534 = vmul.f32 %v525, %v532
        %v535 = vadd.f32 %v534, 0.0
        %s536 = sld [smem:[#allocation3 + $0x1]]
        %s537 = sld [smem:[#allocation3 + $0x32]]
        %v538 = vstv %s536
        %v539 = vmul.f32 %v538, %v387
        %v540 = vadd.f32 %v539, 0.0
        %v541 = vstv %s537
        %v542 = vmul.f32 %v541, %v392
        %v543 = vadd.f32 %v540, %v542
        %s544 = sld [smem:[#allocation3 + $0x8]]
        %s545 = sld [smem:[#allocation3 + $0x39]]
        %v546 = vstv %s544
        %v547 = vmul.f32 %v546, %v387
        %549 = vrot.lane.b32.xlu0 %v547, 112
        %v550 = vpop.permute.xlu0 %549
        %v551 = vrot.slane %v550, 1
        %v552 = vsel %vm404, %v550, %v551
        %v554 = vadd.f32 %v543, %v552
        %v555 = vstv %s545
        %v556 = vmul.f32 %v555, %v392
        %558 = vrot.lane.b32.xlu0 %v556, 112
        %v559 = vpop.permute.xlu0 %558
        %v560 = vrot.slane %v559, 1
        %v561 = vsel %vm404, %v559, %v560
        %v563 = vadd.f32 %v554, %v561
        %s564 = sld [smem:[#allocation3 + $0xf]]
        %s565 = sld [smem:[#allocation3 + $0x40]]
        %v566 = vstv %s564
        %v567 = vmul.f32 %v566, %v387
        %569 = vrot.lane.b32.xlu0 %v567, 96
        %v570 = vpop.permute.xlu0 %569
        %v571 = vrot.slane %v570, 1
        %v572 = vsel %vm425, %v570, %v571
        %v574 = vadd.f32 %v563, %v572
        %v575 = vstv %s565
        %v576 = vmul.f32 %v575, %v392
        %578 = vrot.lane.b32.xlu0 %v576, 96
        %v579 = vpop.permute.xlu0 %578
        %v580 = vrot.slane %v579, 1
        %v581 = vsel %vm425, %v579, %v580
        %v583 = vadd.f32 %v574, %v581
        %s584 = sld [smem:[#allocation3 + $0x16]]
        %s585 = sld [smem:[#allocation3 + $0x47]]
        %v586 = vstv %s584
        %v587 = vmul.f32 %v586, %v387
        %589 = vrot.lane.b32.xlu0 %v587, 80
        %v590 = vpop.permute.xlu0 %589
        %v591 = vrot.slane %v590, 1
        %v592 = vsel %vm446, %v590, %v591
        %v594 = vadd.f32 %v583, %v592
        %v595 = vstv %s585
        %v596 = vmul.f32 %v595, %v392
        %598 = vrot.lane.b32.xlu0 %v596, 80
        %v599 = vpop.permute.xlu0 %598
        %v600 = vrot.slane %v599, 1
        %v601 = vsel %vm446, %v599, %v600
        %v603 = vadd.f32 %v594, %v601
        %s604 = sld [smem:[#allocation3 + $0x1d]]
        %s605 = sld [smem:[#allocation3 + $0x4e]]
        %v606 = vstv %s604
        %v607 = vmul.f32 %v606, %v462
        %609 = vrot.lane.b32.xlu0 %v607, 64
        %v610 = vpop.permute.xlu0 %609
        %v611 = vrot.slane %v610, 7
        %v612 = vsel %vm469, %v611, %v610
        %v614 = vadd.f32 %v603, %v612
        %v615 = vstv %s605
        %v616 = vmul.f32 %v615, %v474
        %618 = vrot.lane.b32.xlu0 %v616, 64
        %v619 = vpop.permute.xlu0 %618
        %v620 = vrot.slane %v619, 7
        %v621 = vsel %vm469, %v620, %v619
        %v623 = vadd.f32 %v614, %v621
        %s624 = sld [smem:[#allocation3 + $0x24]]
        %s625 = sld [smem:[#allocation3 + $0x55]]
        %v626 = vstv %s624
        %v627 = vmul.f32 %v626, %v462
        %629 = vrot.lane.b32.xlu0 %v627, 48
        %v630 = vpop.permute.xlu0 %629
        %v631 = vrot.slane %v630, 7
        %v632 = vsel %vm492, %v631, %v630
        %v634 = vadd.f32 %v623, %v632
        %v635 = vstv %s625
        %v636 = vmul.f32 %v635, %v474
        %638 = vrot.lane.b32.xlu0 %v636, 48
        %v639 = vpop.permute.xlu0 %638
        %v640 = vrot.slane %v639, 7
        %v641 = vsel %vm492, %v640, %v639
        %v643 = vadd.f32 %v634, %v641
        %s644 = sld [smem:[#allocation3 + $0x2b]]
        %s645 = sld [smem:[#allocation3 + $0x5c]]
        %v646 = vstv %s644
        %v647 = vmul.f32 %v646, %v462
        %649 = vrot.lane.b32.xlu0 %v647, 32
        %v650 = vpop.permute.xlu0 %649
        %v651 = vrot.slane %v650, 7
        %v652 = vsel %vm513, %v651, %v650
        %v654 = vadd.f32 %v643, %v652
        %v655 = vstv %s645
        %v656 = vmul.f32 %v655, %v474
        %658 = vrot.lane.b32.xlu0 %v656, 32
        %v659 = vpop.permute.xlu0 %658
        %v660 = vrot.slane %v659, 7
        %v661 = vsel %vm513, %v660, %v659
        %v663 = vadd.f32 %v654, %v661
        %s664 = scalar_lea.vmem %s2, 1
        %v665 = vld [vmem:[%s664] ss:$8 sm:$0x3]
        %667 = vrot.lane.b32.xlu0 %v665, 78
        %v668 = vpop.permute.xlu0 %667
        %v669 = vrot.slane %v668, 7
        %vm670 = vcmask 637952
        %v671 = vsel %vm670, %v669, %v668
        %v673 = vmul.f32 %v663, %v671
        %675 = vrot.lane.b32.xlu0 %v673, 127
        %v676 = vpop.permute.xlu0 %675
        %v677 = vrot.slane %v676, 1
        %vm678 = vcmask 1039360
        %v679 = vsel %vm678, %v676, %v677
        %v681 = vadd.f32 %v535, %v679
        %s682 = sld [smem:[#allocation3 + $0x2]]
        %s683 = sld [smem:[#allocation3 + $0x33]]
        %v684 = vstv %s682
        %v685 = vmul.f32 %v684, %v387
        %v686 = vadd.f32 %v685, 0.0
        %v687 = vstv %s683
        %v688 = vmul.f32 %v687, %v392
        %v689 = vadd.f32 %v686, %v688
        %s690 = sld [smem:[#allocation3 + $0x9]]
        %s691 = sld [smem:[#allocation3 + $0x3a]]
        %v692 = vstv %s690
        %v693 = vmul.f32 %v692, %v387
        %695 = vrot.lane.b32.xlu0 %v693, 112
        %v696 = vpop.permute.xlu0 %695
        %v697 = vrot.slane %v696, 1
        %v698 = vsel %vm404, %v696, %v697
        %v700 = vadd.f32 %v689, %v698
        %v701 = vstv %s691
        %v702 = vmul.f32 %v701, %v392
        %704 = vrot.lane.b32.xlu0 %v702, 112
        %v705 = vpop.permute.xlu0 %704
        %v706 = vrot.slane %v705, 1
        %v707 = vsel %vm404, %v705, %v706
        %v709 = vadd.f32 %v700, %v707
        %s710 = sld [smem:[#allocation3 + $0x10]]
        %s711 = sld [smem:[#allocation3 + $0x41]]
        %v712 = vstv %s710
        %v713 = vmul.f32 %v712, %v387
        %715 = vrot.lane.b32.xlu0 %v713, 96
        %v716 = vpop.permute.xlu0 %715
        %v717 = vrot.slane %v716, 1
        %v718 = vsel %vm425, %v716, %v717
        %v720 = vadd.f32 %v709, %v718
        %v721 = vstv %s711
        %v722 = vmul.f32 %v721, %v392
        %724 = vrot.lane.b32.xlu0 %v722, 96
        %v725 = vpop.permute.xlu0 %724
        %v726 = vrot.slane %v725, 1
        %v727 = vsel %vm425, %v725, %v726
        %v729 = vadd.f32 %v720, %v727
        %s730 = sld [smem:[#allocation3 + $0x17]]
        %s731 = sld [smem:[#allocation3 + $0x48]]
        %v732 = vstv %s730
        %v733 = vmul.f32 %v732, %v387
        %735 = vrot.lane.b32.xlu0 %v733, 80
        %v736 = vpop.permute.xlu0 %735
        %v737 = vrot.slane %v736, 1
        %v738 = vsel %vm446, %v736, %v737
        %v740 = vadd.f32 %v729, %v738
        %v741 = vstv %s731
        %v742 = vmul.f32 %v741, %v392
        %744 = vrot.lane.b32.xlu0 %v742, 80
        %v745 = vpop.permute.xlu0 %744
        %v746 = vrot.slane %v745, 1
        %v747 = vsel %vm446, %v745, %v746
        %v749 = vadd.f32 %v740, %v747
        %s750 = sld [smem:[#allocation3 + $0x1e]]
        %s751 = sld [smem:[#allocation3 + $0x4f]]
        %v752 = vstv %s750
        %v753 = vmul.f32 %v752, %v462
        %755 = vrot.lane.b32.xlu0 %v753, 64
        %v756 = vpop.permute.xlu0 %755
        %v757 = vrot.slane %v756, 7
        %v758 = vsel %vm469, %v757, %v756
        %v760 = vadd.f32 %v749, %v758
        %v761 = vstv %s751
        %v762 = vmul.f32 %v761, %v474
        %764 = vrot.lane.b32.xlu0 %v762, 64
        %v765 = vpop.permute.xlu0 %764
        %v766 = vrot.slane %v765, 7
        %v767 = vsel %vm469, %v766, %v765
        %v769 = vadd.f32 %v760, %v767
        %s770 = sld [smem:[#allocation3 + $0x25]]
        %s771 = sld [smem:[#allocation3 + $0x56]]
        %v772 = vstv %s770
        %v773 = vmul.f32 %v772, %v462
        %775 = vrot.lane.b32.xlu0 %v773, 48
        %v776 = vpop.permute.xlu0 %775
        %v777 = vrot.slane %v776, 7
        %v778 = vsel %vm492, %v777, %v776
        %v780 = vadd.f32 %v769, %v778
        %v781 = vstv %s771
        %v782 = vmul.f32 %v781, %v474
        %784 = vrot.lane.b32.xlu0 %v782, 48
        %v785 = vpop.permute.xlu0 %784
        %v786 = vrot.slane %v785, 7
        %v787 = vsel %vm492, %v786, %v785
        %v789 = vadd.f32 %v780, %v787
        %s790 = sld [smem:[#allocation3 + $0x2c]]
        %s791 = sld [smem:[#allocation3 + $0x5d]]
        %v792 = vstv %s790
        %v793 = vmul.f32 %v792, %v462
        %795 = vrot.lane.b32.xlu0 %v793, 32
        %v796 = vpop.permute.xlu0 %795
        %v797 = vrot.slane %v796, 7
        %v798 = vsel %vm513, %v797, %v796
        %v800 = vadd.f32 %v789, %v798
        %v801 = vstv %s791
        %v802 = vmul.f32 %v801, %v474
        %804 = vrot.lane.b32.xlu0 %v802, 32
        %v805 = vpop.permute.xlu0 %804
        %v806 = vrot.slane %v805, 7
        %v807 = vsel %vm513, %v806, %v805
        %v809 = vadd.f32 %v800, %v807
        %s810 = scalar_lea.vmem %s2, 2
        %v811 = vld [vmem:[%s810] ss:$8 sm:$0x3]
        %813 = vrot.lane.b32.xlu0 %v811, 79
        %v814 = vpop.permute.xlu0 %813
        %v815 = vrot.slane %v814, 7
        %vm816 = vcmask 646144
        %v817 = vsel %vm816, %v815, %v814
        %v819 = vmul.f32 %v809, %v817
        %821 = vrot.lane.b32.xlu0 %v819, 126
        %v822 = vpop.permute.xlu0 %821
        %v823 = vrot.slane %v822, 1
        %vm824 = vcmask 1031168
        %v825 = vsel %vm824, %v822, %v823
        %v827 = vadd.f32 %v681, %v825
        %s828 = sld [smem:[#allocation3 + $0x3]]
        %s829 = sld [smem:[#allocation3 + $0x34]]
        %v830 = vstv %s828
        %v831 = vmul.f32 %v830, %v387
        %v832 = vadd.f32 %v831, 0.0
        %v833 = vstv %s829
        %v834 = vmul.f32 %v833, %v392
        %v835 = vadd.f32 %v832, %v834
        %s836 = sld [smem:[#allocation3 + $0xa]]
        %s837 = sld [smem:[#allocation3 + $0x3b]]
        %v838 = vstv %s836
        %v839 = vmul.f32 %v838, %v387
        %841 = vrot.lane.b32.xlu0 %v839, 112
        %v842 = vpop.permute.xlu0 %841
        %v843 = vrot.slane %v842, 1
        %v844 = vsel %vm404, %v842, %v843
        %v846 = vadd.f32 %v835, %v844
        %v847 = vstv %s837
        %v848 = vmul.f32 %v847, %v392
        %850 = vrot.lane.b32.xlu0 %v848, 112
        %v851 = vpop.permute.xlu0 %850
        %v852 = vrot.slane %v851, 1
        %v853 = vsel %vm404, %v851, %v852
        %v855 = vadd.f32 %v846, %v853
        %s856 = sld [smem:[#allocation3 + $0x11]]
        %s857 = sld [smem:[#allocation3 + $0x42]]
        %v858 = vstv %s856
        %v859 = vmul.f32 %v858, %v387
        %861 = vrot.lane.b32.xlu0 %v859, 96
        %v862 = vpop.permute.xlu0 %861
        %v863 = vrot.slane %v862, 1
        %v864 = vsel %vm425, %v862, %v863
        %v866 = vadd.f32 %v855, %v864
        %v867 = vstv %s857
        %v868 = vmul.f32 %v867, %v392
        %870 = vrot.lane.b32.xlu0 %v868, 96
        %v871 = vpop.permute.xlu0 %870
        %v872 = vrot.slane %v871, 1
        %v873 = vsel %vm425, %v871, %v872
        %v875 = vadd.f32 %v866, %v873
        %s876 = sld [smem:[#allocation3 + $0x18]]
        %s877 = sld [smem:[#allocation3 + $0x49]]
        %v878 = vld [vmem:[%s363] ss:$2 sm:$0x3]
        %v879 = vstv %s876
        %v880 = vmul.f32 %v879, %v878
        %882 = vrot.lane.b32.xlu0 %v880, 80
        %v883 = vpop.permute.xlu0 %882
        %v884 = vrot.slane %v883, 7
        %v885 = vsel %vm446, %v884, %v883
        %v887 = vadd.f32 %v875, %v885
        %v888 = vld [vmem:[%s383] ss:$2 sm:$0x3]
        %v889 = vstv %s877
        %v890 = vmul.f32 %v889, %v888
        %892 = vrot.lane.b32.xlu0 %v890, 80
        %v893 = vpop.permute.xlu0 %892
        %v894 = vrot.slane %v893, 7
        %v895 = vsel %vm446, %v894, %v893
        %v897 = vadd.f32 %v887, %v895
        %s898 = sld [smem:[#allocation3 + $0x1f]]
        %s899 = sld [smem:[#allocation3 + $0x50]]
        %v900 = vstv %s898
        %v901 = vmul.f32 %v900, %v462
        %903 = vrot.lane.b32.xlu0 %v901, 64
        %v904 = vpop.permute.xlu0 %903
        %v905 = vrot.slane %v904, 7
        %v906 = vsel %vm469, %v905, %v904
        %v908 = vadd.f32 %v897, %v906
        %v909 = vstv %s899
        %v910 = vmul.f32 %v909, %v474
        %912 = vrot.lane.b32.xlu0 %v910, 64
        %v913 = vpop.permute.xlu0 %912
        %v914 = vrot.slane %v913, 7
        %v915 = vsel %vm469, %v914, %v913
        %v917 = vadd.f32 %v908, %v915
        %s918 = sld [smem:[#allocation3 + $0x26]]
        %s919 = sld [smem:[#allocation3 + $0x57]]
        %v920 = vstv %s918
        %v921 = vmul.f32 %v920, %v462
        %923 = vrot.lane.b32.xlu0 %v921, 48
        %v924 = vpop.permute.xlu0 %923
        %v925 = vrot.slane %v924, 7
        %v926 = vsel %vm492, %v925, %v924
        %v928 = vadd.f32 %v917, %v926
        %v929 = vstv %s919
        %v930 = vmul.f32 %v929, %v474
        %932 = vrot.lane.b32.xlu0 %v930, 48
        %v933 = vpop.permute.xlu0 %932
        %v934 = vrot.slane %v933, 7
        %v935 = vsel %vm492, %v934, %v933
        %v937 = vadd.f32 %v928, %v935
        %s938 = sld [smem:[#allocation3 + $0x2d]]
        %s939 = sld [smem:[#allocation3 + $0x5e]]
        %v940 = vstv %s938
        %v941 = vmul.f32 %v940, %v462
        %943 = vrot.lane.b32.xlu0 %v941, 32
        %v944 = vpop.permute.xlu0 %943
        %v945 = vrot.slane %v944, 7
        %v946 = vsel %vm513, %v945, %v944
        %v948 = vadd.f32 %v937, %v946
        %v949 = vstv %s939
        %v950 = vmul.f32 %v949, %v474
        %952 = vrot.lane.b32.xlu0 %v950, 32
        %v953 = vpop.permute.xlu0 %952
        %v954 = vrot.slane %v953, 7
        %v955 = vsel %vm513, %v954, %v953
        %v957 = vadd.f32 %v948, %v955
        %959 = vrot.lane.b32.xlu0 %v957, 125
        %v960 = vpop.permute.xlu0 %959
        %v961 = vrot.slane %v960, 1
        %vm962 = vcmask 1022976
        %v963 = vsel %vm962, %v960, %v961
        %v965 = vadd.f32 %v827, %v963
        %s966 = sld [smem:[#allocation3 + $0x4]]
        %s967 = sld [smem:[#allocation3 + $0x35]]
        %v968 = vstv %s966
        %v969 = vmul.f32 %v968, %v387
        %v970 = vadd.f32 %v969, 0.0
        %v971 = vstv %s967
        %v972 = vmul.f32 %v971, %v392
        %v973 = vadd.f32 %v970, %v972
        %s974 = sld [smem:[#allocation3 + $0xb]]
        %s975 = sld [smem:[#allocation3 + $0x3c]]
        %v976 = vstv %s974
        %v977 = vmul.f32 %v976, %v387
        %979 = vrot.lane.b32.xlu0 %v977, 112
        %v980 = vpop.permute.xlu0 %979
        %v981 = vrot.slane %v980, 1
        %v982 = vsel %vm404, %v980, %v981
        %v984 = vadd.f32 %v973, %v982
        %v985 = vstv %s975
        %v986 = vmul.f32 %v985, %v392
        %988 = vrot.lane.b32.xlu0 %v986, 112
        %v989 = vpop.permute.xlu0 %988
        %v990 = vrot.slane %v989, 1
        %v991 = vsel %vm404, %v989, %v990
        %v993 = vadd.f32 %v984, %v991
        %s994 = sld [smem:[#allocation3 + $0x12]]
        %s995 = sld [smem:[#allocation3 + $0x43]]
        %v996 = vstv %s994
        %v997 = vmul.f32 %v996, %v387
        %999 = vrot.lane.b32.xlu0 %v997, 96
        %v1000 = vpop.permute.xlu0 %999
        %v1001 = vrot.slane %v1000, 1
        %v1002 = vsel %vm425, %v1000, %v1001
        %v1004 = vadd.f32 %v993, %v1002
        %v1005 = vstv %s995
        %v1006 = vmul.f32 %v1005, %v392
        %1008 = vrot.lane.b32.xlu0 %v1006, 96
        %v1009 = vpop.permute.xlu0 %1008
        %v1010 = vrot.slane %v1009, 1
        %v1011 = vsel %vm425, %v1009, %v1010
        %v1013 = vadd.f32 %v1004, %v1011
        %s1014 = sld [smem:[#allocation3 + $0x19]]
        %s1015 = sld [smem:[#allocation3 + $0x4a]]
        %v1016 = vstv %s1014
        %v1017 = vmul.f32 %v1016, %v462
        %1019 = vrot.lane.b32.xlu0 %v1017, 80
        %v1020 = vpop.permute.xlu0 %1019
        %v1021 = vrot.slane %v1020, 7
        %v1022 = vsel %vm446, %v1021, %v1020
        %v1024 = vadd.f32 %v1013, %v1022
        %v1025 = vstv %s1015
        %v1026 = vmul.f32 %v1025, %v474
        %1028 = vrot.lane.b32.xlu0 %v1026, 80
        %v1029 = vpop.permute.xlu0 %1028
        %v1030 = vrot.slane %v1029, 7
        %v1031 = vsel %vm446, %v1030, %v1029
        %v1033 = vadd.f32 %v1024, %v1031
        %s1034 = sld [smem:[#allocation3 + $0x20]]
        %s1035 = sld [smem:[#allocation3 + $0x51]]
        %v1036 = vstv %s1034
        %v1037 = vmul.f32 %v1036, %v462
        %1039 = vrot.lane.b32.xlu0 %v1037, 64
        %v1040 = vpop.permute.xlu0 %1039
        %v1041 = vrot.slane %v1040, 7
        %v1042 = vsel %vm469, %v1041, %v1040
        %v1044 = vadd.f32 %v1033, %v1042
        %v1045 = vstv %s1035
        %v1046 = vmul.f32 %v1045, %v474
        %1048 = vrot.lane.b32.xlu0 %v1046, 64
        %v1049 = vpop.permute.xlu0 %1048
        %v1050 = vrot.slane %v1049, 7
        %v1051 = vsel %vm469, %v1050, %v1049
        %v1053 = vadd.f32 %v1044, %v1051
        %s1054 = sld [smem:[#allocation3 + $0x27]]
        %s1055 = sld [smem:[#allocation3 + $0x58]]
        %v1056 = vstv %s1054
        %v1057 = vmul.f32 %v1056, %v462
        %1059 = vrot.lane.b32.xlu0 %v1057, 48
        %v1060 = vpop.permute.xlu0 %1059
        %v1061 = vrot.slane %v1060, 7
        %v1062 = vsel %vm492, %v1061, %v1060
        %v1064 = vadd.f32 %v1053, %v1062
        %v1065 = vstv %s1055
        %v1066 = vmul.f32 %v1065, %v474
        %1068 = vrot.lane.b32.xlu0 %v1066, 48
        %v1069 = vpop.permute.xlu0 %1068
        %v1070 = vrot.slane %v1069, 7
        %v1071 = vsel %vm492, %v1070, %v1069
        %v1073 = vadd.f32 %v1064, %v1071
        %s1074 = sld [smem:[#allocation3 + $0x2e]]
        %s1075 = sld [smem:[#allocation3 + $0x5f]]
        %v1076 = vstv %s1074
        %v1077 = vmul.f32 %v1076, %v462
        %1079 = vrot.lane.b32.xlu0 %v1077, 32
        %v1080 = vpop.permute.xlu0 %1079
        %v1081 = vrot.slane %v1080, 7
        %v1082 = vsel %vm513, %v1081, %v1080
        %v1084 = vadd.f32 %v1073, %v1082
        %v1085 = vstv %s1075
        %v1086 = vmul.f32 %v1085, %v474
        %1088 = vrot.lane.b32.xlu0 %v1086, 32
        %v1089 = vpop.permute.xlu0 %1088
        %v1090 = vrot.slane %v1089, 7
        %v1091 = vsel %vm513, %v1090, %v1089
        %v1093 = vadd.f32 %v1084, %v1091
        %s1094 = scalar_lea.vmem %s2, 4
        %v1095 = vld [vmem:[%s1094] ss:$8 sm:$0x3]
        %1097 = vrot.lane.b32.xlu0 %v1095, 81
        %v1098 = vpop.permute.xlu0 %1097
        %v1099 = vrot.slane %v1098, 7
        %vm1100 = vcmask 662528
        %v1101 = vsel %vm1100, %v1099, %v1098
        %v1103 = vmul.f32 %v1093, %v1101
        %1105 = vrot.lane.b32.xlu0 %v1103, 124
        %v1106 = vpop.permute.xlu0 %1105
        %v1107 = vrot.slane %v1106, 1
        %vm1108 = vcmask 1014784
        %v1109 = vsel %vm1108, %v1106, %v1107
        %v1111 = vadd.f32 %v965, %v1109
        %s1112 = sld [smem:[#allocation3 + $0x5]]
        %s1113 = sld [smem:[#allocation3 + $0x36]]
        %v1114 = vstv %s1112
        %v1115 = vmul.f32 %v1114, %v387
        %v1116 = vadd.f32 %v1115, 0.0
        %v1117 = vstv %s1113
        %v1118 = vmul.f32 %v1117, %v392
        %v1119 = vadd.f32 %v1116, %v1118
        %s1120 = sld [smem:[#allocation3 + $0xc]]
        %s1121 = sld [smem:[#allocation3 + $0x3d]]
        %v1122 = vstv %s1120
        %v1123 = vmul.f32 %v1122, %v387
        %1125 = vrot.lane.b32.xlu0 %v1123, 112
        %v1126 = vpop.permute.xlu0 %1125
        %v1127 = vrot.slane %v1126, 1
        %v1128 = vsel %vm404, %v1126, %v1127
        %v1130 = vadd.f32 %v1119, %v1128
        %v1131 = vstv %s1121
        %v1132 = vmul.f32 %v1131, %v392
        %1134 = vrot.lane.b32.xlu0 %v1132, 112
        %v1135 = vpop.permute.xlu0 %1134
        %v1136 = vrot.slane %v1135, 1
        %v1137 = vsel %vm404, %v1135, %v1136
        %v1139 = vadd.f32 %v1130, %v1137
        %s1140 = sld [smem:[#allocation3 + $0x13]]
        %s1141 = sld [smem:[#allocation3 + $0x44]]
        %v1142 = vstv %s1140
        %v1143 = vmul.f32 %v1142, %v387
        %1145 = vrot.lane.b32.xlu0 %v1143, 96
        %v1146 = vpop.permute.xlu0 %1145
        %v1147 = vrot.slane %v1146, 1
        %v1148 = vsel %vm425, %v1146, %v1147
        %v1150 = vadd.f32 %v1139, %v1148
        %v1151 = vstv %s1141
        %v1152 = vmul.f32 %v1151, %v392
        %1154 = vrot.lane.b32.xlu0 %v1152, 96
        %v1155 = vpop.permute.xlu0 %1154
        %v1156 = vrot.slane %v1155, 1
        %v1157 = vsel %vm425, %v1155, %v1156
        %v1159 = vadd.f32 %v1150, %v1157
        %s1160 = sld [smem:[#allocation3 + $0x1a]]
        %s1161 = sld [smem:[#allocation3 + $0x4b]]
        %v1162 = vstv %s1160
        %v1163 = vmul.f32 %v1162, %v462
        %1165 = vrot.lane.b32.xlu0 %v1163, 80
        %v1166 = vpop.permute.xlu0 %1165
        %v1167 = vrot.slane %v1166, 7
        %v1168 = vsel %vm446, %v1167, %v1166
        %v1170 = vadd.f32 %v1159, %v1168
        %v1171 = vstv %s1161
        %v1172 = vmul.f32 %v1171, %v474
        %1174 = vrot.lane.b32.xlu0 %v1172, 80
        %v1175 = vpop.permute.xlu0 %1174
        %v1176 = vrot.slane %v1175, 7
        %v1177 = vsel %vm446, %v1176, %v1175
        %v1179 = vadd.f32 %v1170, %v1177
        %s1180 = sld [smem:[#allocation3 + $0x21]]
        %s1181 = sld [smem:[#allocation3 + $0x52]]
        %v1182 = vstv %s1180
        %v1183 = vmul.f32 %v1182, %v462
        %1185 = vrot.lane.b32.xlu0 %v1183, 64
        %v1186 = vpop.permute.xlu0 %1185
        %v1187 = vrot.slane %v1186, 7
        %v1188 = vsel %vm469, %v1187, %v1186
        %v1190 = vadd.f32 %v1179, %v1188
        %v1191 = vstv %s1181
        %v1192 = vmul.f32 %v1191, %v474
        %1194 = vrot.lane.b32.xlu0 %v1192, 64
        %v1195 = vpop.permute.xlu0 %1194
        %v1196 = vrot.slane %v1195, 7
        %v1197 = vsel %vm469, %v1196, %v1195
        %v1199 = vadd.f32 %v1190, %v1197
        %s1200 = sld [smem:[#allocation3 + $0x28]]
        %s1201 = sld [smem:[#allocation3 + $0x59]]
        %v1202 = vstv %s1200
        %v1203 = vmul.f32 %v1202, %v462
        %1205 = vrot.lane.b32.xlu0 %v1203, 48
        %v1206 = vpop.permute.xlu0 %1205
        %v1207 = vrot.slane %v1206, 7
        %v1208 = vsel %vm492, %v1207, %v1206
        %v1210 = vadd.f32 %v1199, %v1208
        %v1211 = vstv %s1201
        %v1212 = vmul.f32 %v1211, %v474
        %1214 = vrot.lane.b32.xlu0 %v1212, 48
        %v1215 = vpop.permute.xlu0 %1214
        %v1216 = vrot.slane %v1215, 7
        %v1217 = vsel %vm492, %v1216, %v1215
        %v1219 = vadd.f32 %v1210, %v1217
        %s1220 = sld [smem:[#allocation3 + $0x2f]]
        %s1221 = sld [smem:[#allocation3 + $0x60]]
        %v1222 = vstv %s1220
        %v1223 = vmul.f32 %v1222, %v462
        %1225 = vrot.lane.b32.xlu0 %v1223, 32
        %v1226 = vpop.permute.xlu0 %1225
        %v1227 = vrot.slane %v1226, 7
        %v1228 = vsel %vm513, %v1227, %v1226
        %v1230 = vadd.f32 %v1219, %v1228
        %v1231 = vstv %s1221
        %v1232 = vmul.f32 %v1231, %v474
        %1234 = vrot.lane.b32.xlu0 %v1232, 32
        %v1235 = vpop.permute.xlu0 %1234
        %v1236 = vrot.slane %v1235, 7
        %v1237 = vsel %vm513, %v1236, %v1235
        %v1239 = vadd.f32 %v1230, %v1237
        %s1240 = scalar_lea.vmem %s2, 5
        %v1241 = vld [vmem:[%s1240] ss:$8 sm:$0x3]
        %1243 = vrot.lane.b32.xlu0 %v1241, 82
        %v1244 = vpop.permute.xlu0 %1243
        %v1245 = vrot.slane %v1244, 7
        %vm1246 = vcmask 670720
        %v1247 = vsel %vm1246, %v1245, %v1244
        %v1249 = vmul.f32 %v1239, %v1247
        %1251 = vrot.lane.b32.xlu0 %v1249, 123
        %v1252 = vpop.permute.xlu0 %1251
        %v1253 = vrot.slane %v1252, 1
        %vm1254 = vcmask 1006592
        %v1255 = vsel %vm1254, %v1252, %v1253
        %v1257 = vadd.f32 %v1111, %v1255
        %s1258 = sld [smem:[#allocation3 + $0x6]]
        %s1259 = sld [smem:[#allocation3 + $0x37]]
        %v1260 = vstv %s1258
        %v1261 = vmul.f32 %v1260, %v387
        %v1262 = vadd.f32 %v1261, 0.0
        %v1263 = vstv %s1259
        %v1264 = vmul.f32 %v1263, %v392
        %v1265 = vadd.f32 %v1262, %v1264
        %s1266 = sld [smem:[#allocation3 + $0xd]]
        %s1267 = sld [smem:[#allocation3 + $0x3e]]
        %v1268 = vstv %s1266
        %v1269 = vmul.f32 %v1268, %v387
        %1271 = vrot.lane.b32.xlu0 %v1269, 112
        %v1272 = vpop.permute.xlu0 %1271
        %v1273 = vrot.slane %v1272, 1
        %v1274 = vsel %vm404, %v1272, %v1273
        %v1276 = vadd.f32 %v1265, %v1274
        %v1277 = vstv %s1267
        %v1278 = vmul.f32 %v1277, %v392
        %1280 = vrot.lane.b32.xlu0 %v1278, 112
        %v1281 = vpop.permute.xlu0 %1280
        %v1282 = vrot.slane %v1281, 1
        %v1283 = vsel %vm404, %v1281, %v1282
        %v1285 = vadd.f32 %v1276, %v1283
        %s1286 = sld [smem:[#allocation3 + $0x14]]
        %s1287 = sld [smem:[#allocation3 + $0x45]]
        %v1288 = vstv %s1286
        %v1289 = vmul.f32 %v1288, %v387
        %1291 = vrot.lane.b32.xlu0 %v1289, 96
        %v1292 = vpop.permute.xlu0 %1291
        %v1293 = vrot.slane %v1292, 1
        %v1294 = vsel %vm425, %v1292, %v1293
        %v1296 = vadd.f32 %v1285, %v1294
        %v1297 = vstv %s1287
        %v1298 = vmul.f32 %v1297, %v392
        %1300 = vrot.lane.b32.xlu0 %v1298, 96
        %v1301 = vpop.permute.xlu0 %1300
        %v1302 = vrot.slane %v1301, 1
        %v1303 = vsel %vm425, %v1301, %v1302
        %v1305 = vadd.f32 %v1296, %v1303
        %s1306 = sld [smem:[#allocation3 + $0x1b]]
        %s1307 = sld [smem:[#allocation3 + $0x4c]]
        %v1308 = vstv %s1306
        %v1309 = vmul.f32 %v1308, %v462
        %1311 = vrot.lane.b32.xlu0 %v1309, 80
        %v1312 = vpop.permute.xlu0 %1311
        %v1313 = vrot.slane %v1312, 7
        %v1314 = vsel %vm446, %v1313, %v1312
        %v1316 = vadd.f32 %v1305, %v1314
        %v1317 = vstv %s1307
        %v1318 = vmul.f32 %v1317, %v474
        %1320 = vrot.lane.b32.xlu0 %v1318, 80
        %v1321 = vpop.permute.xlu0 %1320
        %v1322 = vrot.slane %v1321, 7
        %v1323 = vsel %vm446, %v1322, %v1321
        %v1325 = vadd.f32 %v1316, %v1323
        %s1326 = sld [smem:[#allocation3 + $0x22]]
        %s1327 = sld [smem:[#allocation3 + $0x53]]
        %v1328 = vstv %s1326
        %v1329 = vmul.f32 %v1328, %v462
        %1331 = vrot.lane.b32.xlu0 %v1329, 64
        %v1332 = vpop.permute.xlu0 %1331
        %v1333 = vrot.slane %v1332, 7
        %v1334 = vsel %vm469, %v1333, %v1332
        %v1336 = vadd.f32 %v1325, %v1334
        %v1337 = vstv %s1327
        %v1338 = vmul.f32 %v1337, %v474
        %1340 = vrot.lane.b32.xlu0 %v1338, 64
        %v1341 = vpop.permute.xlu0 %1340
        %v1342 = vrot.slane %v1341, 7
        %v1343 = vsel %vm469, %v1342, %v1341
        %v1345 = vadd.f32 %v1336, %v1343
        %s1346 = sld [smem:[#allocation3 + $0x29]]
        %s1347 = sld [smem:[#allocation3 + $0x5a]]
        %v1348 = vstv %s1346
        %v1349 = vmul.f32 %v1348, %v462
        %1351 = vrot.lane.b32.xlu0 %v1349, 48
        %v1352 = vpop.permute.xlu0 %1351
        %v1353 = vrot.slane %v1352, 7
        %v1354 = vsel %vm492, %v1353, %v1352
        %v1356 = vadd.f32 %v1345, %v1354
        %v1357 = vstv %s1347
        %v1358 = vmul.f32 %v1357, %v474
        %1360 = vrot.lane.b32.xlu0 %v1358, 48
        %v1361 = vpop.permute.xlu0 %1360
        %v1362 = vrot.slane %v1361, 7
        %v1363 = vsel %vm492, %v1362, %v1361
        %v1365 = vadd.f32 %v1356, %v1363
        %s1366 = sld [smem:[#allocation3 + $0x30]]
        %s1367 = sld [smem:[#allocation3 + $0x61]]
        %v1368 = vstv %s1366
        %v1369 = vmul.f32 %v1368, %v462
        %1371 = vrot.lane.b32.xlu0 %v1369, 32
        %v1372 = vpop.permute.xlu0 %1371
        %v1373 = vrot.slane %v1372, 7
        %v1374 = vsel %vm513, %v1373, %v1372
        %v1376 = vadd.f32 %v1365, %v1374
        %v1377 = vstv %s1367
        %v1378 = vmul.f32 %v1377, %v474
        %1380 = vrot.lane.b32.xlu0 %v1378, 32
        %v1381 = vpop.permute.xlu0 %1380
        %v1382 = vrot.slane %v1381, 7
        %v1383 = vsel %vm513, %v1382, %v1381
        %v1385 = vadd.f32 %v1376, %v1383
        %s1386 = scalar_lea.vmem %s2, 6
        %v1387 = vld [vmem:[%s1386] ss:$8 sm:$0x3]
        %1389 = vrot.lane.b32.xlu0 %v1387, 83
        %v1390 = vpop.permute.xlu0 %1389
        %v1391 = vrot.slane %v1390, 7
        %vm1392 = vcmask 678912
        %v1393 = vsel %vm1392, %v1391, %v1390
        %v1395 = vmul.f32 %v1385, %v1393
        %1397 = vrot.lane.b32.xlu0 %v1395, 122
        %v1398 = vpop.permute.xlu0 %1397
        %v1399 = vrot.slane %v1398, 1
        %vm1400 = vcmask 998400
        %v1401 = vsel %vm1400, %v1398, %v1399
        %v1403 = vadd.f32 %v1257, %v1401
        %v1404 = vxor.u32 %v1403, 2147483648
        %v1405 = vmul.f32 %v1404, 1.442695
        %v1406 = vpow.pop %v1405
        %v1407 = vadd.f32 %v1406, 1.0
        %v1408 = vrcp.pop %v1407
        %v1409 = vmul.f32 1.0, %v1408
        %v1411 = vlaneseq
        %v1412 = vshrl.u32 %v1411, 7
        %v1413 = vsub.s32 0, %v1412
        %v1414 = vrot.slane %v1409, %v1413
        %v1415 = vlaneseq
        %v1416 = vshrl.u32 %v1415, 7
        %v1417 = vsub.s32 1, %v1416
        %v1418 = vrot.slane %v1409, %v1417
        %v1419 = vlaneseq
        %v1420 = vshrl.u32 %v1419, 7
        %v1421 = vsub.s32 2, %v1420
        %v1422 = vrot.slane %v1409, %v1421
        %1423 = vrot.lane.b32.xlu0 %v1414, 51
        %v1424 = vpop.permute.xlu0 %1423
        %1425 = vrot.lane.b32.xlu0 %v1418, 51
        %v1426 = vpop.permute.xlu0 %1425
        %1427 = vrot.lane.b32.xlu0 %v1422, 51
        %v1428 = vpop.permute.xlu0 %1427
        %vm1429 = vcmask 416768
        %v1430 = vsel %vm1429, %v1424, %v1426
        %v1431 = vsel %vm1429, %v1426, %v1428
        %v1434 = vmul.f32 %v293, %v1430
        %v1435 = vmul.f32 %v294, %v1431
        %v1436 = vmul.f32 %v295, %v1430
        %v1437 = vmul.f32 %v296, %v1431
        %v1438 = vmul.f32 %v297, %v1430
        %v1439 = vmul.f32 %v298, %v1431
        %v1440 = vmul.f32 %v299, %v1430
        %v1441 = vmul.f32 %v300, %v1431
        %v1442 = vadd.f32 %v1434, %v1435
        %1443 = vadd.xlane.f32.xlu0 %v1442
        %v1444 = vpop.xlane.xlu0 %1443
        %v1445 = vadd.f32 %v1436, %v1437
        %1446 = vadd.xlane.f32.xlu0 %v1445
        %v1447 = vpop.xlane.xlu0 %1446
        %v1448 = vadd.f32 %v1438, %v1439
        %1449 = vadd.xlane.f32.xlu0 %v1448
        %v1450 = vpop.xlane.xlu0 %1449
        %v1451 = vadd.f32 %v1440, %v1441
        %1452 = vadd.xlane.f32.xlu0 %v1451
        %v1453 = vpop.xlane.xlu0 %1452
        %v1454 = vmul.f32 %v1444, 0.00390625
        %v1455 = vmul.f32 %v1447, 0.00390625
        %v1456 = vmul.f32 %v1450, 0.00390625
        %v1457 = vmul.f32 %v1453, 0.00390625
        %v1458 = vld [vmem:[%s3] sm:$0xff]
        %v1459 = vld [vmem:[%s3 + $0x8] sm:$0xff]
        %v1460 = vld [vmem:[%s3 + $0x10] sm:$0xff]
        %v1461 = vld [vmem:[%s3 + $0x18] sm:$0xff]
        %v1462 = vmul.f32 %v1458, %v1454
        %v1463 = vmul.f32 %v1459, %v1455
        %v1464 = vmul.f32 %v1460, %v1456
        %v1465 = vmul.f32 %v1461, %v1457
        %vm1466 = vcmask 15360
        %v1467 = vsel %vm1466, %v1462, 0.0
        %v1468 = vsel %vm1466, %v1463, 0.0
        %v1469 = vadd.f32 %v1467, %v1468
        %v1470 = vsel %vm1466, %v1464, 0.0
        %v1471 = vadd.f32 %v1469, %v1470
        %v1472 = vsel %vm1466, %v1465, 0.0
        %v1473 = vadd.f32 %v1471, %v1472
        %v1474 = vrot.slane %v1473, 4
        %v1475 = vadd.f32 %v1473, %v1474
        %v1476 = vrot.slane %v1475, 2
        %v1477 = vadd.f32 %v1475, %v1476
        %v1478 = vrot.slane %v1477, 1
        %v1479 = vadd.f32 %v1477, %v1478
        %v1480 = vld [vmem:[%s4] sm:$0x1]
        %v1481 = vadd.f32 %v1479, %v1480
        %v1482 = vmax.f32 %v1481, 0.0
        %v1483 = vld [vmem:[%s5] sm:$0xff]
        %v1484 = vld [vmem:[%s5 + $0x8] sm:$0xff]
        %v1485 = vld [vmem:[%s5 + $0x10] sm:$0xff]
        %v1486 = vld [vmem:[%s5 + $0x18] sm:$0xff]
        %v1487 = vlaneseq
        %v1488 = vshrl.u32 %v1487, 7
        %v1489 = vsub.s32 0, %v1488
        %v1490 = vrot.slane %v1482, %v1489
        %v1491 = vmul.f32 %v1483, %v1490
        %v1492 = vmul.f32 %v1484, %v1490
        %v1493 = vmul.f32 %v1485, %v1490
        %v1494 = vmul.f32 %v1486, %v1490
        %v1495 = vsel %vm1466, %v1491, 0.0
        %1496 = vadd.xlane.f32.xlu0 %v1495
        %v1497 = vpop.xlane.xlu0 %1496
        %v1498 = vsel %vm1466, %v1492, 0.0
        %1499 = vadd.xlane.f32.xlu0 %v1498
        %v1500 = vpop.xlane.xlu0 %1499
        %v1501 = vsel %vm1466, %v1493, 0.0
        %1502 = vadd.xlane.f32.xlu0 %v1501
        %v1503 = vpop.xlane.xlu0 %1502
        %v1504 = vsel %vm1466, %v1494, 0.0
        %1505 = vadd.xlane.f32.xlu0 %v1504
        %v1506 = vpop.xlane.xlu0 %1505
        %v1507 = vld [vmem:[%s6] sm:$0xff]
        %v1508 = vld [vmem:[%s6 + $0x8] sm:$0xff]
        %v1509 = vld [vmem:[%s6 + $0x10] sm:$0xff]
        %v1510 = vld [vmem:[%s6 + $0x18] sm:$0xff]
        %v1511 = vadd.f32 %v1497, %v1507
        %v1512 = vadd.f32 %v1500, %v1508
        %v1513 = vadd.f32 %v1503, %v1509
        %v1514 = vadd.f32 %v1506, %v1510
        %v1515 = vxor.u32 %v1511, 2147483648
        %v1516 = vxor.u32 %v1512, 2147483648
        %v1517 = vxor.u32 %v1513, 2147483648
        %v1518 = vxor.u32 %v1514, 2147483648
        %v1519 = vmul.f32 %v1515, 1.442695
        %v1520 = vpow.pop %v1519
        %v1521 = vmul.f32 %v1516, 1.442695
        %v1522 = vpow.pop %v1521
        %v1523 = vmul.f32 %v1517, 1.442695
        %v1524 = vpow.pop %v1523
        %v1525 = vmul.f32 %v1518, 1.442695
        %v1526 = vpow.pop %v1525
        %v1527 = vadd.f32 %v1520, 1.0
        %v1528 = vadd.f32 %v1522, 1.0
        %v1529 = vadd.f32 %v1524, 1.0
        %v1530 = vadd.f32 %v1526, 1.0
        %v1531 = vrcp.pop %v1527
        %v1532 = vmul.f32 1.0, %v1531
        %v1533 = vrcp.pop %v1528
        %v1534 = vmul.f32 1.0, %v1533
        %v1535 = vrcp.pop %v1529
        %v1536 = vmul.f32 1.0, %v1535
        %v1537 = vrcp.pop %v1530
        %v1538 = vmul.f32 1.0, %v1537
        %1540 = vset.pattern.permute.xlu0 0
        %1541 = vperm.xlu0 %1540, %v1532
        %v1542 = vpop.permute.xlu0 %1541
        %1545 = vset.pattern.permute.xlu0 0
        %1546 = vperm.xlu0 %1545, %v1534
        %v1547 = vpop.permute.xlu0 %1546
        %1550 = vset.pattern.permute.xlu0 0
        %1551 = vperm.xlu0 %1550, %v1536
        %v1552 = vpop.permute.xlu0 %1551
        %1555 = vset.pattern.permute.xlu0 0
        %1556 = vperm.xlu0 %1555, %v1538
        %v1557 = vpop.permute.xlu0 %1556
        %v1559 = vmul.f32 %v1434, %v1542
        %v1560 = vmul.f32 %v1435, %v1542
        %v1561 = vmul.f32 %v1436, %v1547
        %v1562 = vmul.f32 %v1437, %v1547
        %v1563 = vmul.f32 %v1438, %v1552
        %v1564 = vmul.f32 %v1439, %v1552
        %v1565 = vmul.f32 %v1440, %v1557
        %v1566 = vmul.f32 %v1441, %v1557
        %1567 = vst [vmem:[%s292] sm:$0xff] %v1559
        %1568 = vst [vmem:[%s292 + $0x8] sm:$0xff] %v1560
        %1569 = vst [vmem:[%s292 + $0x10] sm:$0xff] %v1561
        %1570 = vst [vmem:[%s292 + $0x18] sm:$0xff] %v1562
        %1571 = vst [vmem:[%s292 + $0x20] sm:$0xff] %v1563
        %1572 = vst [vmem:[%s292 + $0x28] sm:$0xff] %v1564
        %1573 = vst [vmem:[%s292 + $0x30] sm:$0xff] %v1565
        %1574 = vst [vmem:[%s292 + $0x38] sm:$0xff] %v1566
        %p1575 = scmp.lt.s32.totalorder %s19, 1
        %s1576 = scalar_select %p1575, %s19, 1
        %s1577 = smul.addr %s1576, 8
        %s1578 = smul.addr %s1577, 8
        %s1579 = scalar_lea.vmem %s7, %s1578
        // Predicated region
        $region53: #{se_module_forward.1} parent=47 // pred_check
          %p1580 = pneg %p189
        $region54: #{se_module_forward.1} parent=47 // pred_check_branch
          %1582 = sbr.rel (%p1580) target = $region56
        $region55: #{se_module_forward.1} parent=47 // pred_region
          _
        $region56: #{se_module_forward.1} parent=47 // pred_fallthru
          _
      $region48: #{se_module_forward.1} parent=5 // pred_fallthru
        _
      %p1583 = scmp.le.s32.totalorder 2, %s14
      // Predicated region
      $region57: #{se_module_forward.1} parent=5 // pred_check
        %p1584 = pneg %p1583
      $region58: #{se_module_forward.1} parent=5 // pred_check_branch
        %1586 = sbr.rel (%p1584) target = $region60
      $region59: #{se_module_forward.1} parent=5 // pred_region
        %s1587 = ssub.s32 %s14, 2
        // Predicated region
        $region61: #{se_module_forward.1} parent=59 // pred_check
          %p1588 = pneg %p195
        $region62: #{se_module_forward.1} parent=59 // pred_check_branch
          %1590 = sbr.rel (%p1588) target = $region64
        $region63: #{se_module_forward.1} parent=59 // pred_region
          %p1591 = scmp.lt.s32.totalorder %s20, 1
          %s1592 = scalar_select %p1591, %s20, 1
          %s1593 = smul.addr %s1592, 8
          %s1594 = smul.addr %s1593, 8
          %s1595 = scalar_lea.vmem %s7, %s1594
        $region64: #{se_module_forward.1} parent=59 // pred_fallthru
          _
      $region60: #{se_module_forward.1} parent=5 // pred_fallthru
        _
    $region6: #{se_module_forward.1} parent=1 // loop_footer
      %s18 = sadd.s32 1, %s14
    $region7: #{se_module_forward.1} parent=1 // loop_footer_branch
      %13 = sbr.rel target = $region3
    $region8: #{se_module_forward.1} parent=1 // loop_exit
      _
    %1596 = vsyncpa [#allocation4], 1
    %s1597 = scalar_lea.sflag [#allocation4], 1
    %1598 = vsyncpa %s1597, 1

</llo_original>
